<compile_context>
chip_gen: v7x
topology: tpu7x:2x2x1
jax: 0.10.0
libtpu: 0.0.40
codegen_flags: <defaults>
</compile_context>

<pallas_src>
import functools

import jax
import jax.numpy as jnp
from jax.experimental import pallas as pl
from jax.experimental.pallas import tpu as pltpu


# ---------------------------------------------------------------------------
# Fused kernel: MaxPool2x2 -> Conv3x3+LeakyReLU -> Conv3x3+LeakyReLU
# ---------------------------------------------------------------------------
def _down_fused_kernel(xw_ref, w1_ref, b1_ref, w2_ref, b2_ref, o_ref,
                       im1_ref, pad_ref, im2_ref, *,
                       hh, wh, c_in, c_mid, negative_slope):
    # xw_ref : (4, hh+2, wh+2, c_in)  2x2-window elements of the pad-by-2 input
    # w1_ref : (9*c_in,  c_mid)       conv1 weights, taps folded into K
    # b1_ref : (1, c_mid)
    # w2_ref : (9*c_mid, c_pad)       conv2 weights, output lanes padded to 128
    # b2_ref : (1, c_pad)
    # o_ref  : (1, hh*wh, c_pad)      lane-dense output block
    # im1_ref: VMEM (hh*wh, 9*c_in)   im2col scratch for conv1
    # pad_ref: VMEM (hh+2, wh+2, c_mid) zero-halo'd conv1 activation
    # im2_ref: VMEM (hh*wh, 9*c_mid)  im2col scratch for conv2

    # ---- fused MaxPool2d(2): three VPU max ops over the window axis --------
    p = jnp.maximum(jnp.maximum(xw_ref[0], xw_ref[1]),
                    jnp.maximum(xw_ref[2], xw_ref[3]))
    # p: (hh+2, wh+2, c_in) = pooled image INCLUDING the zero halo needed by
    # the SAME conv (the input was zero-padded by 2 before pooling, so the
    # border 2x2 windows are all zeros).

    # ---- conv1: build im2col in VMEM, single MXU contraction ---------------
    for dh in range(3):
        for dw in range(3):
            t = dh * 3 + dw
            im1_ref[:, t * c_in:(t + 1) * c_in] = (
                p[dh:dh + hh, dw:dw + wh, :].reshape(hh * wh, c_in))
    y1 = jnp.dot(im1_ref[...], w1_ref[...],
                 preferred_element_type=jnp.float32)        # (hh*wh, c_mid)
    y1 = y1 + b1_ref[...]
    y1 = jnp.where(y1 > 0, y1, negative_slope * y1)          # LeakyReLU(0.2)

    # ---- conv2: zero-halo the VMEM-resident activation, same contraction ---
    pad_ref[...] = jnp.zeros_like(pad_ref)
    pad_ref[1:hh + 1, 1:wh + 1, :] = y1.reshape(hh, wh, c_mid)
    for dh in range(3):
        for dw in range(3):
            t = dh * 3 + dw
            im2_ref[:, t * c_mid:(t + 1) * c_mid] = (
                pad_ref[dh:dh + hh, dw:dw + wh, :].reshape(hh * wh, c_mid))
    y2 = jnp.dot(im2_ref[...], w2_ref[...],
                 preferred_element_type=jnp.float32)        # (hh*wh, c_pad)
    y2 = y2 + b2_ref[...]
    y2 = jnp.where(y2 > 0, y2, negative_slope * y2)          # LeakyReLU(0.2)

    o_ref[0] = y2.astype(o_ref.dtype)                        # unmasked, 128-lane store


# ---------------------------------------------------------------------------
# Down_layer.forward
# ---------------------------------------------------------------------------
def down_layer_forward(x_nchw, params, *, negative_slope=0.2):
    w1, b1, w2, b2 = params["w1"], params["b1"], params["w2"], params["b2"]
    N, Cin, H, W = x_nchw.shape
    assert H % 2 == 0 and W % 2 == 0, "MaxPool2d(2) expects even H, W"
    Cmid = w1.shape[-1]
    Cout = w2.shape[-1]
    Hh, Wh = H // 2, W // 2
    Hp2, Wp2 = Hh + 2, Wh + 2                       # pooled + conv halo
    LANE = 128
    Cpad = ((Cout + LANE - 1) // LANE) * LANE       # lane-dense output width

    # --- input prep (pure layout; XLA fuses into the one unavoidable pass) --
    x = jnp.transpose(x_nchw, (0, 2, 3, 1))                     # NCHW -> NHWC
    xp = jnp.pad(x, ((0, 0), (2, 2), (2, 2), (0, 0)))           # pad-by-2
    xw = xp.reshape(N, Hp2, 2, Wp2, 2, Cin)
    xw = xw.transpose(0, 2, 4, 1, 3, 5).reshape(N * 4, Hp2, Wp2, Cin)

    # --- weight prep: fold the 9 taps into K; lane-pad conv2's outputs ------
    w1f = w1.reshape(9 * Cin, Cmid)
    b1f = b1.reshape(1, Cmid)
    w2f = jnp.pad(w2.reshape(9 * Cmid, Cout), ((0, 0), (0, Cpad - Cout)))
    b2f = jnp.pad(b2.reshape(1, Cout), ((0, 0), (0, Cpad - Cout)))

    kernel = functools.partial(
        _down_fused_kernel, hh=Hh, wh=Wh, c_in=Cin, c_mid=Cmid,
        negative_slope=negative_slope)

    out = pl.pallas_call(
        kernel,
        out_shape=jax.ShapeDtypeStruct((N, Hh * Wh, Cpad), x.dtype),
        grid=(N,),
        in_specs=[
            pl.BlockSpec((4, Hp2, Wp2, Cin), lambda n: (n, 0, 0, 0)),
            pl.BlockSpec((9 * Cin, Cmid), lambda n: (0, 0)),
            pl.BlockSpec((1, Cmid), lambda n: (0, 0)),
            pl.BlockSpec((9 * Cmid, Cpad), lambda n: (0, 0)),
            pl.BlockSpec((1, Cpad), lambda n: (0, 0)),
        ],
        out_specs=pl.BlockSpec((1, Hh * Wh, Cpad), lambda n: (n, 0, 0)),
        scratch_shapes=[
            pltpu.VMEM((Hh * Wh, 9 * Cin), jnp.float32),
            pltpu.VMEM((Hp2, Wp2, Cmid), jnp.float32),
            pltpu.VMEM((Hh * Wh, 9 * Cmid), jnp.float32),
        ],
        compiler_params=pltpu.CompilerParams(
            dimension_semantics=("parallel",)),
    )(xw, w1f, b1f, w2f, b2f)

    out = out[:, :, :Cout].reshape(N, Hh, Wh, Cout)
    return jnp.transpose(out, (0, 3, 1, 2))                     # NHWC -> NCHW
# TODO(synk): the module's `loss` (F.cross_entropy) is not part of forward();
# it is not implemented here.


# ---------------------------------------------------------------------------
# Pure-JAX reference for correctness checking
# ---------------------------------------------------------------------------
def reference_forward(x_nchw, params):
    x = jnp.transpose(x_nchw, (0, 2, 3, 1))
    x = jax.lax.reduce_window(x, -jnp.inf, jax.lax.max,
                              (1, 2, 2, 1), (1, 2, 2, 1), "VALID")

    def conv(x, w, b):
        y = jax.lax.conv_general_dilated(
            x, w, (1, 1), "SAME",
            dimension_numbers=("NHWC", "HWIO", "NHWC"))
        y = y + b
        return jnp.where(y > 0, y, 0.2 * y)

    x = conv(x, params["w1"], params["b1"])
    x = conv(x, params["w2"], params["b2"])
    return jnp.transpose(x, (0, 3, 1, 2))


if __name__ == "__main__":
    key = jax.random.PRNGKey(0)
    k1, k2, k3, k4, kx = jax.random.split(key, 5)

    in_channels, out_channels = 4, 8
    N, H, W = 2, 16, 16

    params = {
        "w1": jax.random.normal(k1, (3, 3, in_channels, out_channels),
                                jnp.float32) * 0.1,
        "b1": jax.random.normal(k2, (out_channels,), jnp.float32) * 0.05,
        "w2": jax.random.normal(k3, (3, 3, out_channels, out_channels),
                                jnp.float32) * 0.1,
        "b2": jax.random.normal(k4, (out_channels,), jnp.float32) * 0.05,
    }

    x = jax.random.normal(kx, (N, in_channels, H, W), jnp.float32)

    out = jax.block_until_ready(down_layer_forward(x, params))
    ref = reference_forward(x, params)

    assert out.shape == (N, out_channels, H // 2, W // 2), out.shape
    assert jnp.allclose(out, ref, rtol=1e-4, atol=1e-4), \
        float(jnp.max(jnp.abs(out - ref)))

    print("KERNEL_OK")
</pallas_src>

<mosaic_0001>
module attributes {stable_mosaic.version = 11 : i64} {
  func.func @_down_fused_kernel(%arg0: i32, %arg1: memref<4x10x10x4xf32, #tpu.memory_space<vmem>>, %arg2: memref<36x8xf32, #tpu.memory_space<vmem>>, %arg3: memref<1x8xf32, #tpu.memory_space<vmem>>, %arg4: memref<72x128xf32, #tpu.memory_space<vmem>>, %arg5: memref<1x128xf32, #tpu.memory_space<vmem>>, %arg6: memref<1x64x128xf32, #tpu.memory_space<vmem>>, %arg7: memref<64x36xf32, #tpu.memory_space<vmem>>, %arg8: memref<10x10x8xf32, #tpu.memory_space<vmem>>, %arg9: memref<64x72xf32, #tpu.memory_space<vmem>>) attributes {dimension_semantics = [#tpu.dimension_semantics<parallel>], iteration_bounds = array<i64: 2>, scalar_prefetch = 0 : i64, scratch_operands = 3 : i64, tpu.core_type = #tpu.core_type<tc>, window_params = [{transform_indices = @transform_0, window_bounds = array<i64: 4, 10, 10, 4>}, {pipeline_mode = #tpu.pipeline_mode<synchronous>, transform_indices = @transform_1, window_bounds = array<i64: 36, 8>}, {pipeline_mode = #tpu.pipeline_mode<synchronous>, transform_indices = @transform_2, window_bounds = array<i64: 1, 8>}, {pipeline_mode = #tpu.pipeline_mode<synchronous>, transform_indices = @transform_3, window_bounds = array<i64: 72, 128>}, {pipeline_mode = #tpu.pipeline_mode<synchronous>, transform_indices = @transform_4, window_bounds = array<i64: 1, 128>}, {transform_indices = @transform_5, window_bounds = array<i64: 1, 64, 128>}]} {
    %c0 = arith.constant 0 : index
    %c0_0 = arith.constant 0 : index
    %c0_1 = arith.constant 0 : index
    %c0_2 = arith.constant 0 : index
    %0 = vector.load %arg1[%c0, %c0_0, %c0_1, %c0_2] : memref<4x10x10x4xf32, #tpu.memory_space<vmem>>, vector<1x10x10x4xf32>
    %1 = vector.shape_cast %0 : vector<1x10x10x4xf32> to vector<10x10x4xf32>
    %c1 = arith.constant 1 : index
    %c0_3 = arith.constant 0 : index
    %c0_4 = arith.constant 0 : index
    %c0_5 = arith.constant 0 : index
    %2 = vector.load %arg1[%c1, %c0_3, %c0_4, %c0_5] : memref<4x10x10x4xf32, #tpu.memory_space<vmem>>, vector<1x10x10x4xf32>
    %3 = vector.shape_cast %2 : vector<1x10x10x4xf32> to vector<10x10x4xf32>
    %4 = arith.maximumf %1, %3 : vector<10x10x4xf32>
    %c2 = arith.constant 2 : index
    %c0_6 = arith.constant 0 : index
    %c0_7 = arith.constant 0 : index
    %c0_8 = arith.constant 0 : index
    %5 = vector.load %arg1[%c2, %c0_6, %c0_7, %c0_8] : memref<4x10x10x4xf32, #tpu.memory_space<vmem>>, vector<1x10x10x4xf32>
    %6 = vector.shape_cast %5 : vector<1x10x10x4xf32> to vector<10x10x4xf32>
    %c3 = arith.constant 3 : index
    %c0_9 = arith.constant 0 : index
    %c0_10 = arith.constant 0 : index
    %c0_11 = arith.constant 0 : index
    %7 = vector.load %arg1[%c3, %c0_9, %c0_10, %c0_11] : memref<4x10x10x4xf32, #tpu.memory_space<vmem>>, vector<1x10x10x4xf32>
    %8 = vector.shape_cast %7 : vector<1x10x10x4xf32> to vector<10x10x4xf32>
    %9 = arith.maximumf %6, %8 : vector<10x10x4xf32>
    %10 = arith.maximumf %4, %9 : vector<10x10x4xf32>
    %11 = vector.extract_strided_slice %10 {offsets = [0, 0, 0], sizes = [8, 8, 4], strides = [1, 1, 1]} : vector<10x10x4xf32> to vector<8x8x4xf32>
    %12 = vector.shape_cast %11 : vector<8x8x4xf32> to vector<64x4xf32>
    %c0_12 = arith.constant 0 : index
    %c0_13 = arith.constant 0 : index
    %13 = vector.load %arg7[%c0_12, %c0_13] : memref<64x36xf32, #tpu.memory_space<vmem>>, vector<64x4xf32>
    tpu.vector_store %arg7[%c0_12, %c0_13], %12 {strides = array<i32>} : memref<64x36xf32, #tpu.memory_space<vmem>>, vector<64x4xf32>,
    %14 = vector.extract_strided_slice %10 {offsets = [0, 1, 0], sizes = [8, 8, 4], strides = [1, 1, 1]} : vector<10x10x4xf32> to vector<8x8x4xf32>
    %15 = vector.shape_cast %14 : vector<8x8x4xf32> to vector<64x4xf32>
    %c0_14 = arith.constant 0 : index
    %c4 = arith.constant 4 : index
    %16 = vector.load %arg7[%c0_14, %c4] : memref<64x36xf32, #tpu.memory_space<vmem>>, vector<64x4xf32>
    tpu.vector_store %arg7[%c0_14, %c4], %15 {strides = array<i32>} : memref<64x36xf32, #tpu.memory_space<vmem>>, vector<64x4xf32>,
    %17 = vector.extract_strided_slice %10 {offsets = [0, 2, 0], sizes = [8, 8, 4], strides = [1, 1, 1]} : vector<10x10x4xf32> to vector<8x8x4xf32>
    %18 = vector.shape_cast %17 : vector<8x8x4xf32> to vector<64x4xf32>
    %c0_15 = arith.constant 0 : index
    %c8 = arith.constant 8 : index
    %19 = vector.load %arg7[%c0_15, %c8] : memref<64x36xf32, #tpu.memory_space<vmem>>, vector<64x4xf32>
    tpu.vector_store %arg7[%c0_15, %c8], %18 {strides = array<i32>} : memref<64x36xf32, #tpu.memory_space<vmem>>, vector<64x4xf32>,
    %20 = vector.extract_strided_slice %10 {offsets = [1, 0, 0], sizes = [8, 8, 4], strides = [1, 1, 1]} : vector<10x10x4xf32> to vector<8x8x4xf32>
    %21 = vector.shape_cast %20 : vector<8x8x4xf32> to vector<64x4xf32>
    %c0_16 = arith.constant 0 : index
    %c12 = arith.constant 12 : index
    %22 = vector.load %arg7[%c0_16, %c12] : memref<64x36xf32, #tpu.memory_space<vmem>>, vector<64x4xf32>
    tpu.vector_store %arg7[%c0_16, %c12], %21 {strides = array<i32>} : memref<64x36xf32, #tpu.memory_space<vmem>>, vector<64x4xf32>,
    %23 = vector.extract_strided_slice %10 {offsets = [1, 1, 0], sizes = [8, 8, 4], strides = [1, 1, 1]} : vector<10x10x4xf32> to vector<8x8x4xf32>
    %24 = vector.shape_cast %23 : vector<8x8x4xf32> to vector<64x4xf32>
    %c0_17 = arith.constant 0 : index
    %c16 = arith.constant 16 : index
    %25 = vector.load %arg7[%c0_17, %c16] : memref<64x36xf32, #tpu.memory_space<vmem>>, vector<64x4xf32>
    tpu.vector_store %arg7[%c0_17, %c16], %24 {strides = array<i32>} : memref<64x36xf32, #tpu.memory_space<vmem>>, vector<64x4xf32>,
    %26 = vector.extract_strided_slice %10 {offsets = [1, 2, 0], sizes = [8, 8, 4], strides = [1, 1, 1]} : vector<10x10x4xf32> to vector<8x8x4xf32>
    %27 = vector.shape_cast %26 : vector<8x8x4xf32> to vector<64x4xf32>
    %c0_18 = arith.constant 0 : index
    %c20 = arith.constant 20 : index
    %28 = vector.load %arg7[%c0_18, %c20] : memref<64x36xf32, #tpu.memory_space<vmem>>, vector<64x4xf32>
    tpu.vector_store %arg7[%c0_18, %c20], %27 {strides = array<i32>} : memref<64x36xf32, #tpu.memory_space<vmem>>, vector<64x4xf32>,
    %29 = vector.extract_strided_slice %10 {offsets = [2, 0, 0], sizes = [8, 8, 4], strides = [1, 1, 1]} : vector<10x10x4xf32> to vector<8x8x4xf32>
    %30 = vector.shape_cast %29 : vector<8x8x4xf32> to vector<64x4xf32>
    %c0_19 = arith.constant 0 : index
    %c24 = arith.constant 24 : index
    %31 = vector.load %arg7[%c0_19, %c24] : memref<64x36xf32, #tpu.memory_space<vmem>>, vector<64x4xf32>
    tpu.vector_store %arg7[%c0_19, %c24], %30 {strides = array<i32>} : memref<64x36xf32, #tpu.memory_space<vmem>>, vector<64x4xf32>,
    %32 = vector.extract_strided_slice %10 {offsets = [2, 1, 0], sizes = [8, 8, 4], strides = [1, 1, 1]} : vector<10x10x4xf32> to vector<8x8x4xf32>
    %33 = vector.shape_cast %32 : vector<8x8x4xf32> to vector<64x4xf32>
    %c0_20 = arith.constant 0 : index
    %c28 = arith.constant 28 : index
    %34 = vector.load %arg7[%c0_20, %c28] : memref<64x36xf32, #tpu.memory_space<vmem>>, vector<64x4xf32>
    tpu.vector_store %arg7[%c0_20, %c28], %33 {strides = array<i32>} : memref<64x36xf32, #tpu.memory_space<vmem>>, vector<64x4xf32>,
    %35 = vector.extract_strided_slice %10 {offsets = [2, 2, 0], sizes = [8, 8, 4], strides = [1, 1, 1]} : vector<10x10x4xf32> to vector<8x8x4xf32>
    %36 = vector.shape_cast %35 : vector<8x8x4xf32> to vector<64x4xf32>
    %c0_21 = arith.constant 0 : index
    %c32 = arith.constant 32 : index
    %37 = vector.load %arg7[%c0_21, %c32] : memref<64x36xf32, #tpu.memory_space<vmem>>, vector<64x4xf32>
    tpu.vector_store %arg7[%c0_21, %c32], %36 {strides = array<i32>} : memref<64x36xf32, #tpu.memory_space<vmem>>, vector<64x4xf32>,
    %c0_22 = arith.constant 0 : index
    %c0_23 = arith.constant 0 : index
    %38 = vector.load %arg7[%c0_22, %c0_23] : memref<64x36xf32, #tpu.memory_space<vmem>>, vector<64x36xf32>
    %c0_24 = arith.constant 0 : index
    %c0_25 = arith.constant 0 : index
    %39 = vector.load %arg2[%c0_24, %c0_25] : memref<36x8xf32, #tpu.memory_space<vmem>>, vector<36x8xf32>
    %cst = arith.constant dense<0.000000e+00> : vector<64x8xf32>
    %40 = tpu.matmul %38, %39, %cst {dimension_numbers = #tpu.dot_dimension_numbers<[1], [0], [0], [1], [0, 0, 1, 1], [], []>} : vector<64x36xf32>, vector<36x8xf32>, vector<64x8xf32> -> vector<64x8xf32>
    %c0_26 = arith.constant 0 : index
    %c0_27 = arith.constant 0 : index
    %41 = vector.load %arg3[%c0_26, %c0_27] : memref<1x8xf32, #tpu.memory_space<vmem>>, vector<1x8xf32>
    %42 = vector.broadcast %41 : vector<1x8xf32> to vector<64x8xf32>
    %43 = arith.addf %40, %42 : vector<64x8xf32>
    %cst_28 = arith.constant 0.000000e+00 : f32
    %44 = vector.broadcast %cst_28 : f32 to vector<64x8xf32>
    %45 = arith.cmpf ogt, %43, %44 : vector<64x8xf32>
    %cst_29 = arith.constant 2.000000e-01 : f32
    %46 = vector.broadcast %cst_29 : f32 to vector<64x8xf32>
    %47 = arith.mulf %46, %43 : vector<64x8xf32>
    %48 = arith.select %45, %43, %47 : vector<64x8xi1>, vector<64x8xf32>
    %cst_30 = arith.constant 0.000000e+00 : f32
    %49 = vector.broadcast %cst_30 : f32 to vector<10x10x8xf32>
    %c0_31 = arith.constant 0 : index
    %c0_32 = arith.constant 0 : index
    %c0_33 = arith.constant 0 : index
    %50 = vector.load %arg8[%c0_31, %c0_32, %c0_33] : memref<10x10x8xf32, #tpu.memory_space<vmem>>, vector<10x10x8xf32>
    tpu.vector_store %arg8[%c0_31, %c0_32, %c0_33], %49 {strides = array<i32>} : memref<10x10x8xf32, #tpu.memory_space<vmem>>, vector<10x10x8xf32>,
    %51 = vector.shape_cast %48 : vector<64x8xf32> to vector<8x8x8xf32>
    %c1_34 = arith.constant 1 : index
    %c1_35 = arith.constant 1 : index
    %c0_36 = arith.constant 0 : index
    %52 = vector.load %arg8[%c1_34, %c1_35, %c0_36] : memref<10x10x8xf32, #tpu.memory_space<vmem>>, vector<8x8x8xf32>
    tpu.vector_store %arg8[%c1_34, %c1_35, %c0_36], %51 {strides = array<i32>} : memref<10x10x8xf32, #tpu.memory_space<vmem>>, vector<8x8x8xf32>,
    %c0_37 = arith.constant 0 : index
    %c0_38 = arith.constant 0 : index
    %c0_39 = arith.constant 0 : index
    %53 = vector.load %arg8[%c0_37, %c0_38, %c0_39] : memref<10x10x8xf32, #tpu.memory_space<vmem>>, vector<8x8x8xf32>
    %54 = vector.shape_cast %53 : vector<8x8x8xf32> to vector<64x8xf32>
    %c0_40 = arith.constant 0 : index
    %c0_41 = arith.constant 0 : index
    %55 = vector.load %arg9[%c0_40, %c0_41] : memref<64x72xf32, #tpu.memory_space<vmem>>, vector<64x8xf32>
    tpu.vector_store %arg9[%c0_40, %c0_41], %54 {strides = array<i32>} : memref<64x72xf32, #tpu.memory_space<vmem>>, vector<64x8xf32>,
    %c0_42 = arith.constant 0 : index
    %c1_43 = arith.constant 1 : index
    %c0_44 = arith.constant 0 : index
    %56 = vector.load %arg8[%c0_42, %c1_43, %c0_44] : memref<10x10x8xf32, #tpu.memory_space<vmem>>, vector<8x8x8xf32>
    %57 = vector.shape_cast %56 : vector<8x8x8xf32> to vector<64x8xf32>
    %c0_45 = arith.constant 0 : index
    %c8_46 = arith.constant 8 : index
    %58 = vector.load %arg9[%c0_45, %c8_46] : memref<64x72xf32, #tpu.memory_space<vmem>>, vector<64x8xf32>
    tpu.vector_store %arg9[%c0_45, %c8_46], %57 {strides = array<i32>} : memref<64x72xf32, #tpu.memory_space<vmem>>, vector<64x8xf32>,
    %c0_47 = arith.constant 0 : index
    %c2_48 = arith.constant 2 : index
    %c0_49 = arith.constant 0 : index
    %59 = vector.load %arg8[%c0_47, %c2_48, %c0_49] : memref<10x10x8xf32, #tpu.memory_space<vmem>>, vector<8x8x8xf32>
    %60 = vector.shape_cast %59 : vector<8x8x8xf32> to vector<64x8xf32>
    %c0_50 = arith.constant 0 : index
    %c16_51 = arith.constant 16 : index
    %61 = vector.load %arg9[%c0_50, %c16_51] : memref<64x72xf32, #tpu.memory_space<vmem>>, vector<64x8xf32>
    tpu.vector_store %arg9[%c0_50, %c16_51], %60 {strides = array<i32>} : memref<64x72xf32, #tpu.memory_space<vmem>>, vector<64x8xf32>,
    %c1_52 = arith.constant 1 : index
    %c0_53 = arith.constant 0 : index
    %c0_54 = arith.constant 0 : index
    %62 = vector.load %arg8[%c1_52, %c0_53, %c0_54] : memref<10x10x8xf32, #tpu.memory_space<vmem>>, vector<8x8x8xf32>
    %63 = vector.shape_cast %62 : vector<8x8x8xf32> to vector<64x8xf32>
    %c0_55 = arith.constant 0 : index
    %c24_56 = arith.constant 24 : index
    %64 = vector.load %arg9[%c0_55, %c24_56] : memref<64x72xf32, #tpu.memory_space<vmem>>, vector<64x8xf32>
    tpu.vector_store %arg9[%c0_55, %c24_56], %63 {strides = array<i32>} : memref<64x72xf32, #tpu.memory_space<vmem>>, vector<64x8xf32>,
    %c1_57 = arith.constant 1 : index
    %c1_58 = arith.constant 1 : index
    %c0_59 = arith.constant 0 : index
    %65 = vector.load %arg8[%c1_57, %c1_58, %c0_59] : memref<10x10x8xf32, #tpu.memory_space<vmem>>, vector<8x8x8xf32>
    %66 = vector.shape_cast %65 : vector<8x8x8xf32> to vector<64x8xf32>
    %c0_60 = arith.constant 0 : index
    %c32_61 = arith.constant 32 : index
    %67 = vector.load %arg9[%c0_60, %c32_61] : memref<64x72xf32, #tpu.memory_space<vmem>>, vector<64x8xf32>
    tpu.vector_store %arg9[%c0_60, %c32_61], %66 {strides = array<i32>} : memref<64x72xf32, #tpu.memory_space<vmem>>, vector<64x8xf32>,
    %c1_62 = arith.constant 1 : index
    %c2_63 = arith.constant 2 : index
    %c0_64 = arith.constant 0 : index
    %68 = vector.load %arg8[%c1_62, %c2_63, %c0_64] : memref<10x10x8xf32, #tpu.memory_space<vmem>>, vector<8x8x8xf32>
    %69 = vector.shape_cast %68 : vector<8x8x8xf32> to vector<64x8xf32>
    %c0_65 = arith.constant 0 : index
    %c40 = arith.constant 40 : index
    %70 = vector.load %arg9[%c0_65, %c40] : memref<64x72xf32, #tpu.memory_space<vmem>>, vector<64x8xf32>
    tpu.vector_store %arg9[%c0_65, %c40], %69 {strides = array<i32>} : memref<64x72xf32, #tpu.memory_space<vmem>>, vector<64x8xf32>,
    %c2_66 = arith.constant 2 : index
    %c0_67 = arith.constant 0 : index
    %c0_68 = arith.constant 0 : index
    %71 = vector.load %arg8[%c2_66, %c0_67, %c0_68] : memref<10x10x8xf32, #tpu.memory_space<vmem>>, vector<8x8x8xf32>
    %72 = vector.shape_cast %71 : vector<8x8x8xf32> to vector<64x8xf32>
    %c0_69 = arith.constant 0 : index
    %c48 = arith.constant 48 : index
    %73 = vector.load %arg9[%c0_69, %c48] : memref<64x72xf32, #tpu.memory_space<vmem>>, vector<64x8xf32>
    tpu.vector_store %arg9[%c0_69, %c48], %72 {strides = array<i32>} : memref<64x72xf32, #tpu.memory_space<vmem>>, vector<64x8xf32>,
    %c2_70 = arith.constant 2 : index
    %c1_71 = arith.constant 1 : index
    %c0_72 = arith.constant 0 : index
    %74 = vector.load %arg8[%c2_70, %c1_71, %c0_72] : memref<10x10x8xf32, #tpu.memory_space<vmem>>, vector<8x8x8xf32>
    %75 = vector.shape_cast %74 : vector<8x8x8xf32> to vector<64x8xf32>
    %c0_73 = arith.constant 0 : index
    %c56 = arith.constant 56 : index
    %76 = vector.load %arg9[%c0_73, %c56] : memref<64x72xf32, #tpu.memory_space<vmem>>, vector<64x8xf32>
    tpu.vector_store %arg9[%c0_73, %c56], %75 {strides = array<i32>} : memref<64x72xf32, #tpu.memory_space<vmem>>, vector<64x8xf32>,
    %c2_74 = arith.constant 2 : index
    %c2_75 = arith.constant 2 : index
    %c0_76 = arith.constant 0 : index
    %77 = vector.load %arg8[%c2_74, %c2_75, %c0_76] : memref<10x10x8xf32, #tpu.memory_space<vmem>>, vector<8x8x8xf32>
    %78 = vector.shape_cast %77 : vector<8x8x8xf32> to vector<64x8xf32>
    %c0_77 = arith.constant 0 : index
    %c64 = arith.constant 64 : index
    %79 = vector.load %arg9[%c0_77, %c64] : memref<64x72xf32, #tpu.memory_space<vmem>>, vector<64x8xf32>
    tpu.vector_store %arg9[%c0_77, %c64], %78 {strides = array<i32>} : memref<64x72xf32, #tpu.memory_space<vmem>>, vector<64x8xf32>,
    %c0_78 = arith.constant 0 : index
    %c0_79 = arith.constant 0 : index
    %80 = vector.load %arg9[%c0_78, %c0_79] : memref<64x72xf32, #tpu.memory_space<vmem>>, vector<64x72xf32>
    %c0_80 = arith.constant 0 : index
    %c0_81 = arith.constant 0 : index
    %81 = vector.load %arg4[%c0_80, %c0_81] : memref<72x128xf32, #tpu.memory_space<vmem>>, vector<72x128xf32>
    %cst_82 = arith.constant dense<0.000000e+00> : vector<64x128xf32>
    %82 = tpu.matmul %80, %81, %cst_82 {dimension_numbers = #tpu.dot_dimension_numbers<[1], [0], [0], [1], [0, 0, 1, 1], [], []>} : vector<64x72xf32>, vector<72x128xf32>, vector<64x128xf32> -> vector<64x128xf32>
    %c0_83 = arith.constant 0 : index
    %c0_84 = arith.constant 0 : index
    %83 = vector.load %arg5[%c0_83, %c0_84] : memref<1x128xf32, #tpu.memory_space<vmem>>, vector<1x128xf32>
    %84 = vector.broadcast %83 : vector<1x128xf32> to vector<64x128xf32>
    %85 = arith.addf %82, %84 : vector<64x128xf32>
    %cst_85 = arith.constant 0.000000e+00 : f32
    %86 = vector.broadcast %cst_85 : f32 to vector<64x128xf32>
    %87 = arith.cmpf ogt, %85, %86 : vector<64x128xf32>
    %cst_86 = arith.constant 2.000000e-01 : f32
    %88 = vector.broadcast %cst_86 : f32 to vector<64x128xf32>
    %89 = arith.mulf %88, %85 : vector<64x128xf32>
    %90 = arith.select %87, %85, %89 : vector<64x128xi1>, vector<64x128xf32>
    %c0_87 = arith.constant 0 : index
    %c0_88 = arith.constant 0 : index
    %c0_89 = arith.constant 0 : index
    %91 = vector.load %arg6[%c0_87, %c0_88, %c0_89] : memref<1x64x128xf32, #tpu.memory_space<vmem>>, vector<1x64x128xf32>
    %92 = vector.shape_cast %91 : vector<1x64x128xf32> to vector<64x128xf32>
    %93 = vector.shape_cast %90 : vector<64x128xf32> to vector<1x64x128xf32>
    tpu.vector_store %arg6[%c0_87, %c0_88, %c0_89], %93 {strides = array<i32>} : memref<1x64x128xf32, #tpu.memory_space<vmem>>, vector<1x64x128xf32>,
    return
  }
  func.func @transform_0(%arg0: i32) -> (i32, i32, i32, i32) {
    %c0_i32 = arith.constant 0 : i32
    %c0_i32_0 = arith.constant 0 : i32
    %c0_i32_1 = arith.constant 0 : i32
    %c0_i32_2 = arith.constant 0 : i32
    return %arg0, %c0_i32, %c0_i32_0, %c0_i32_1 : i32, i32, i32, i32
  }
  func.func @transform_1(%arg0: i32) -> (i32, i32) {
    %c0_i32 = arith.constant 0 : i32
    %c0_i32_0 = arith.constant 0 : i32
    %c0_i32_1 = arith.constant 0 : i32
    return %c0_i32, %c0_i32_0 : i32, i32
  }
  func.func @transform_2(%arg0: i32) -> (i32, i32) {
    %c0_i32 = arith.constant 0 : i32
    %c0_i32_0 = arith.constant 0 : i32
    %c0_i32_1 = arith.constant 0 : i32
    return %c0_i32, %c0_i32_0 : i32, i32
  }
  func.func @transform_3(%arg0: i32) -> (i32, i32) {
    %c0_i32 = arith.constant 0 : i32
    %c0_i32_0 = arith.constant 0 : i32
    %c0_i32_1 = arith.constant 0 : i32
    return %c0_i32, %c0_i32_0 : i32, i32
  }
  func.func @transform_4(%arg0: i32) -> (i32, i32) {
    %c0_i32 = arith.constant 0 : i32
    %c0_i32_0 = arith.constant 0 : i32
    %c0_i32_1 = arith.constant 0 : i32
    return %c0_i32, %c0_i32_0 : i32, i32
  }
  func.func @transform_5(%arg0: i32) -> (i32, i32, i32) {
    %c0_i32 = arith.constant 0 : i32
    %c0_i32_0 = arith.constant 0 : i32
    %c0_i32_1 = arith.constant 0 : i32
    return %arg0, %c0_i32, %c0_i32_0 : i32, i32, i32
  }
}

</mosaic_0001>

<llo_original>
// kernel: tpu_custom_call.1
$region0: #{tpu_custom_call.1}
  #allocation0 [shape = 'u32[]', space=smem, size = 0x4, offset = 0x4, fixed_abs, tag = 'smem constant byte address 0x4 - core index']
  #allocation1 [shape = 'u32[144,128]{1,0:T(1,128)}', space=vmem, size = 0x12000, scoped, tag = 'internal scratch']
  #allocation2 [shape = 'f32[64,36]{1,0:T(8,128)}', space=vmem, size = 0x8000, scoped, tag = 'scratch operand']
  #allocation3 [shape = 'f32[10,10,8]{2,1,0:T(8,128)}', space=vmem, size = 0x14000, scoped, tag = 'scratch operand']
  #allocation4 [shape = 'f32[64,72]{1,0:T(8,128)}', space=vmem, size = 0x8000, scoped, tag = 'scratch operand']
  %s0 = inlined_call_operand.vmem [shape: f32[8,10,10,4], index: 0, kind: input, shape index: {}]
  %s1 = inlined_call_operand.vmem [shape: f32[36,8], index: 1, kind: input, shape index: {}]
  %s2 = inlined_call_operand.vmem [shape: f32[1,8], index: 2, kind: input, shape index: {}]
  %s3 = inlined_call_operand.vmem [shape: f32[72,128], index: 3, kind: input, shape index: {}]
  %s4 = inlined_call_operand.vmem [shape: f32[1,128], index: 4, kind: input, shape index: {}]
  %s5 = inlined_call_operand.hbm [shape: f32[2,64,128], index: 5, kind: output, shape index: {}]
  %s6 = sld [smem:[#allocation0]]
  $region53: #{tpu_custom_call.1} parent=0
    _
  %s8 = ssub.s32 1, %s6
  %s9 = scalar_select 0, %s8, %s6
  $region1: #{tpu_custom_call.1} parent=0
    #allocation5 [shape = 'u8[65536]{0}', space=vmem, size = 0x10000, scoped, tag = 'output window, operand 0']
    #allocation6 [shape = 's32[2]{0}', space=sflag, size = 0x8, scoped, tag = 'scoped memory for tpu_custom_call.1']
    %10 = vsyncpa [#allocation6], 0
    %s11 = scalar_lea.sflag [#allocation6], 1
    %12 = vsyncpa %s11, 0
    loop: start=0, step=1, limit=4
    $region2: #{tpu_custom_call.1} parent=1 // loop_pre_header
      _
    $region3: #{tpu_custom_call.1} parent=1 // loop_header
      %s14 = sphi 0, %s18
      %p15 = scmp.ge.s32.totalorder %s14, 4
      %s24 = sphi 0, %s26
      %s27 = sphi 0, %s24
      %s28 = sphi 0, %s27
      %s44 = sphi 0, %s28
      %s48 = sphi 0, %s48
      %s50 = sphi 0, %s48
      %s51 = sphi 0, %s50
      %s65 = sphi 0, %s51
      %s69 = sphi 0, %s69
      %s71 = sphi 0, %s69
      %s72 = sphi 0, %s71
      %s86 = sphi 0, %s72
      %s90 = sphi 0, %s90
      %s92 = sphi 0, %s90
      %s93 = sphi 0, %s92
      %s107 = sphi 0, %s93
      %s111 = sphi 0, %s111
      %s113 = sphi 0, %s111
      %s114 = sphi 0, %s113
      %s128 = sphi 0, %s114
      %s134 = sphi 0, %s136
      %s137 = sphi 0, %s134
      %s138 = sphi 0, %s137
      %s154 = sphi 0, %s138
    $region4: #{tpu_custom_call.1} parent=1 // loop_header_branch
      %17 = sbr.rel (%p15) target = $region8
    $region5: #{tpu_custom_call.1} parent=1 // loop_body
      %s19 = ssub.s32 %s14, 1
      %s20 = ssub.s32 %s14, 2
      %s21 = sadd.s32 %s14, 1
      %s22 = ssub.s32 %s14, %s21
      %p23 = scmp.eq.s32.totalorder %s22, 0
      %s25 = sadd.s32 %s24, 1
      %s26 = scalar_select %p23, %s24, %s25
      %p29 = pneg %p23
      %p30 = scmp.eq.s32.totalorder %s14, 1
      %p31 = por %p29, %p30
      %p32 = scmp.ne.s32.totalorder %s24, %s27
      %p33 = scmp.eq.s32.totalorder %s14, 0
      %p34 = por %p32, %p33
      %p35 = scmp.ne.s32.totalorder %s24, %s27
      %p36 = scmp.eq.s32.totalorder %s19, 1
      %p37 = por %p35, %p36
      %p38 = scmp.ne.s32.totalorder %s27, %s28
      %p39 = scmp.eq.s32.totalorder %s19, 0
      %p40 = por %p38, %p39
      %p41 = scmp.ne.s32.totalorder %s27, %s28
      %p42 = scmp.eq.s32.totalorder %s20, 1
      %p43 = por %p41, %p42
      %p45 = scmp.ne.s32.totalorder %s28, %s44
      %p46 = scmp.eq.s32.totalorder %s20, 0
      %p47 = por %p45, %p46
      %s49 = sadd.s32 %s48, 1
      %p52 = scmp.eq.s32.totalorder %s14, 1
      %p53 = scmp.ne.s32.totalorder %s48, %s50
      %p54 = scmp.eq.s32.totalorder %s14, 0
      %p55 = por %p53, %p54
      %p56 = scmp.ne.s32.totalorder %s48, %s50
      %p57 = scmp.eq.s32.totalorder %s19, 1
      %p58 = por %p56, %p57
      %p59 = scmp.ne.s32.totalorder %s50, %s51
      %p60 = scmp.eq.s32.totalorder %s19, 0
      %p61 = por %p59, %p60
      %p62 = scmp.ne.s32.totalorder %s50, %s51
      %p63 = scmp.eq.s32.totalorder %s20, 1
      %p64 = por %p62, %p63
      %p66 = scmp.ne.s32.totalorder %s51, %s65
      %p67 = scmp.eq.s32.totalorder %s20, 0
      %p68 = por %p66, %p67
      %s70 = sadd.s32 %s69, 1
      %p73 = scmp.eq.s32.totalorder %s14, 1
      %p74 = scmp.ne.s32.totalorder %s69, %s71
      %p75 = scmp.eq.s32.totalorder %s14, 0
      %p76 = por %p74, %p75
      %p77 = scmp.ne.s32.totalorder %s69, %s71
      %p78 = scmp.eq.s32.totalorder %s19, 1
      %p79 = por %p77, %p78
      %p80 = scmp.ne.s32.totalorder %s71, %s72
      %p81 = scmp.eq.s32.totalorder %s19, 0
      %p82 = por %p80, %p81
      %p83 = scmp.ne.s32.totalorder %s71, %s72
      %p84 = scmp.eq.s32.totalorder %s20, 1
      %p85 = por %p83, %p84
      %p87 = scmp.ne.s32.totalorder %s72, %s86
      %p88 = scmp.eq.s32.totalorder %s20, 0
      %p89 = por %p87, %p88
      %s91 = sadd.s32 %s90, 1
      %p94 = scmp.eq.s32.totalorder %s14, 1
      %p95 = scmp.ne.s32.totalorder %s90, %s92
      %p96 = scmp.eq.s32.totalorder %s14, 0
      %p97 = por %p95, %p96
      %p98 = scmp.ne.s32.totalorder %s90, %s92
      %p99 = scmp.eq.s32.totalorder %s19, 1
      %p100 = por %p98, %p99
      %p101 = scmp.ne.s32.totalorder %s92, %s93
      %p102 = scmp.eq.s32.totalorder %s19, 0
      %p103 = por %p101, %p102
      %p104 = scmp.ne.s32.totalorder %s92, %s93
      %p105 = scmp.eq.s32.totalorder %s20, 1
      %p106 = por %p104, %p105
      %p108 = scmp.ne.s32.totalorder %s93, %s107
      %p109 = scmp.eq.s32.totalorder %s20, 0
      %p110 = por %p108, %p109
      %s112 = sadd.s32 %s111, 1
      %p115 = scmp.eq.s32.totalorder %s14, 1
      %p116 = scmp.ne.s32.totalorder %s111, %s113
      %p117 = scmp.eq.s32.totalorder %s14, 0
      %p118 = por %p116, %p117
      %p119 = scmp.ne.s32.totalorder %s111, %s113
      %p120 = scmp.eq.s32.totalorder %s19, 1
      %p121 = por %p119, %p120
      %p122 = scmp.ne.s32.totalorder %s113, %s114
      %p123 = scmp.eq.s32.totalorder %s19, 0
      %p124 = por %p122, %p123
      %p125 = scmp.ne.s32.totalorder %s113, %s114
      %p126 = scmp.eq.s32.totalorder %s20, 1
      %p127 = por %p125, %p126
      %p129 = scmp.ne.s32.totalorder %s114, %s128
      %p130 = scmp.eq.s32.totalorder %s20, 0
      %p131 = por %p129, %p130
      %s132 = ssub.s32 %s14, %s21
      %p133 = scmp.eq.s32.totalorder %s132, 0
      %s135 = sadd.s32 %s134, 1
      %s136 = scalar_select %p133, %s134, %s135
      %p139 = pneg %p133
      %p140 = scmp.eq.s32.totalorder %s14, 1
      %p141 = por %p139, %p140
      %p142 = scmp.ne.s32.totalorder %s134, %s137
      %p143 = scmp.eq.s32.totalorder %s14, 0
      %p144 = por %p142, %p143
      %p145 = scmp.ne.s32.totalorder %s134, %s137
      %p146 = scmp.eq.s32.totalorder %s19, 1
      %p147 = por %p145, %p146
      %p148 = scmp.ne.s32.totalorder %s137, %s138
      %p149 = scmp.eq.s32.totalorder %s19, 0
      %p150 = por %p148, %p149
      %p151 = scmp.ne.s32.totalorder %s137, %s138
      %p152 = scmp.eq.s32.totalorder %s20, 1
      %p153 = por %p151, %p152
      %p155 = scmp.ne.s32.totalorder %s138, %s154
      %p156 = scmp.eq.s32.totalorder %s20, 0
      %p157 = por %p155, %p156
      %p158 = scmp.le.s32.totalorder 1, %s14
      %p159 = scmp.lt.s32.totalorder %s14, 3
      %p160 = pnand %p158, %p159
      %p161 = pneg %p160
      // Predicated region
      $region9: #{tpu_custom_call.1} parent=5 // pred_check
        _
      $region10: #{tpu_custom_call.1} parent=5 // pred_check_branch
        %163 = sbr.rel (%p160) target = $region12
      $region11: #{tpu_custom_call.1} parent=5 // pred_region
        %s164 = ssub.s32 %s14, 1
        // Predicated region
        $region13: #{tpu_custom_call.1} parent=11 // pred_check
          %p165 = pneg %p61
        $region14: #{tpu_custom_call.1} parent=11 // pred_check_branch
          %167 = sbr.rel (%p165) target = $region16
        $region15: #{tpu_custom_call.1} parent=11 // pred_region
          _
        $region16: #{tpu_custom_call.1} parent=11 // pred_fallthru
          _
        // Predicated region
        $region17: #{tpu_custom_call.1} parent=11 // pred_check
          %p168 = pneg %p82
        $region18: #{tpu_custom_call.1} parent=11 // pred_check_branch
          %170 = sbr.rel (%p168) target = $region20
        $region19: #{tpu_custom_call.1} parent=11 // pred_region
          _
        $region20: #{tpu_custom_call.1} parent=11 // pred_fallthru
          _
        // Predicated region
        $region21: #{tpu_custom_call.1} parent=11 // pred_check
          %p171 = pneg %p103
        $region22: #{tpu_custom_call.1} parent=11 // pred_check_branch
          %173 = sbr.rel (%p171) target = $region24
        $region23: #{tpu_custom_call.1} parent=11 // pred_region
          _
        $region24: #{tpu_custom_call.1} parent=11 // pred_fallthru
          _
        // Predicated region
        $region25: #{tpu_custom_call.1} parent=11 // pred_check
          %p174 = pneg %p124
        $region26: #{tpu_custom_call.1} parent=11 // pred_check_branch
          %176 = sbr.rel (%p174) target = $region28
        $region27: #{tpu_custom_call.1} parent=11 // pred_region
          _
        $region28: #{tpu_custom_call.1} parent=11 // pred_fallthru
          _
      $region12: #{tpu_custom_call.1} parent=5 // pred_fallthru
        _
      %p177 = scmp.lt.s32.totalorder %s14, 2
      // Predicated region
      $region29: #{tpu_custom_call.1} parent=5 // pred_check
        %p178 = pneg %p177
      $region30: #{tpu_custom_call.1} parent=5 // pred_check_branch
        %180 = sbr.rel (%p178) target = $region32
      $region31: #{tpu_custom_call.1} parent=5 // pred_region
        // Predicated region
        $region33: #{tpu_custom_call.1} parent=31 // pred_check
          %p181 = pneg %p34
        $region34: #{tpu_custom_call.1} parent=31 // pred_check_branch
          %183 = sbr.rel (%p181) target = $region36
        $region35: #{tpu_custom_call.1} parent=31 // pred_region
          %s184 = smul.u32 4, %s14
          %p185 = scmp.lt.s32.totalorder %s184, 7
          %s186 = scalar_select %p185, %s184, 7
          %s187 = smul.addr %s186, 20
          %s188 = smul.addr %s187, 8
          %s189 = scalar_lea.vmem %s0, %s188
          %s190 = smul.u32 4, %s14
        $region36: #{tpu_custom_call.1} parent=31 // pred_fallthru
          _
      $region32: #{tpu_custom_call.1} parent=5 // pred_fallthru
        _
      %p191 = scmp.le.s32.totalorder 1, %s14
      %p192 = scmp.lt.s32.totalorder %s14, 3
      %p193 = pnand %p191, %p192
      %p194 = pneg %p193
      // Predicated region
      $region37: #{tpu_custom_call.1} parent=5 // pred_check
        _
      $region38: #{tpu_custom_call.1} parent=5 // pred_check_branch
        %196 = sbr.rel (%p193) target = $region40
      $region39: #{tpu_custom_call.1} parent=5 // pred_region
        %s197 = ssub.s32 %s14, 1
        %s198 = smul.u32 4, %s19
        %p199 = scmp.lt.s32.totalorder %s198, 7
        %s200 = scalar_select %p199, %s198, 7
        %s201 = smul.addr %s200, 20
        %s202 = smul.addr %s201, 8
        %s203 = scalar_lea.vmem %s0, %s202
        %p204 = pneg %p40
        %p205 = pneg %p37
        %p206 = pneg %p61
        %p207 = pneg %p58
        %p208 = pneg %p82
        %p209 = pneg %p79
        %p210 = pneg %p103
        %p211 = pneg %p100
        %p212 = pneg %p124
        %p213 = pneg %p121
        %p214 = pneg %p150
        %p215 = pneg %p147
        %s216 = sand.u32 %s137, 1
        %s217 = scalar_lea.sflag [#allocation6], %s216
        %s218 = sand.u32 %s137, 1
        %s219 = smul.addr %s218, 64
        %s220 = scalar_lea.vmem [#allocation5], %s219
        %s221 = smul.u32 4, %s19
        %p222 = scmp.lt.s32.totalorder %s221, 7
        %s223 = scalar_select %p222, %s221, 7
        %s224 = smul.addr %s223, 20
        %s225 = smul.addr %s224, 8
        %s226 = scalar_lea.vmem %s0, %s225
        %s227 = smul.u32 4, %s19
        %v228 = vld [vmem:[%s226] sm:$0xff]
        %v229 = vld [vmem:[%s226 + $0x8] sm:$0x3]
        %v230 = vld [vmem:[%s226 + $0x10] sm:$0xff]
        %v231 = vld [vmem:[%s226 + $0x18] sm:$0x3]
        %v232 = vld [vmem:[%s226 + $0x20] sm:$0xff]
        %v233 = vld [vmem:[%s226 + $0x28] sm:$0x3]
        %v234 = vld [vmem:[%s226 + $0x30] sm:$0xff]
        %v235 = vld [vmem:[%s226 + $0x38] sm:$0x3]
        %v236 = vld [vmem:[%s226 + $0x40] sm:$0xff]
        %v237 = vld [vmem:[%s226 + $0x48] sm:$0x3]
        %v238 = vld [vmem:[%s226 + $0x50] sm:$0xff]
        %v239 = vld [vmem:[%s226 + $0x58] sm:$0x3]
        %v240 = vld [vmem:[%s226 + $0x60] sm:$0xff]
        %v241 = vld [vmem:[%s226 + $0x68] sm:$0x3]
        %v242 = vld [vmem:[%s226 + $0x70] sm:$0xff]
        %v243 = vld [vmem:[%s226 + $0x78] sm:$0x3]
        %v244 = vld [vmem:[%s226 + $0x80] sm:$0xff]
        %v245 = vld [vmem:[%s226 + $0x88] sm:$0x3]
        %v246 = vld [vmem:[%s226 + $0x90] sm:$0xff]
        %v247 = vld [vmem:[%s226 + $0x98] sm:$0x3]
        %s248 = scalar_lea.vmem %s226, 160
        %v249 = vld [vmem:[%s248] sm:$0xff]
        %v250 = vld [vmem:[%s248 + $0x8] sm:$0x3]
        %v251 = vld [vmem:[%s248 + $0x10] sm:$0xff]
        %v252 = vld [vmem:[%s248 + $0x18] sm:$0x3]
        %v253 = vld [vmem:[%s248 + $0x20] sm:$0xff]
        %v254 = vld [vmem:[%s248 + $0x28] sm:$0x3]
        %v255 = vld [vmem:[%s248 + $0x30] sm:$0xff]
        %v256 = vld [vmem:[%s248 + $0x38] sm:$0x3]
        %v257 = vld [vmem:[%s248 + $0x40] sm:$0xff]
        %v258 = vld [vmem:[%s248 + $0x48] sm:$0x3]
        %v259 = vld [vmem:[%s248 + $0x50] sm:$0xff]
        %v260 = vld [vmem:[%s248 + $0x58] sm:$0x3]
        %v261 = vld [vmem:[%s248 + $0x60] sm:$0xff]
        %v262 = vld [vmem:[%s248 + $0x68] sm:$0x3]
        %v263 = vld [vmem:[%s248 + $0x70] sm:$0xff]
        %v264 = vld [vmem:[%s248 + $0x78] sm:$0x3]
        %v265 = vld [vmem:[%s248 + $0x80] sm:$0xff]
        %v266 = vld [vmem:[%s248 + $0x88] sm:$0x3]
        %v267 = vld [vmem:[%s248 + $0x90] sm:$0xff]
        %v268 = vld [vmem:[%s248 + $0x98] sm:$0x3]
        %v269 = vmax.f32 %v228, %v249
        %v270 = vmax.f32 %v229, %v250
        %v271 = vmax.f32 %v230, %v251
        %v272 = vmax.f32 %v231, %v252
        %v273 = vmax.f32 %v232, %v253
        %v274 = vmax.f32 %v233, %v254
        %v275 = vmax.f32 %v234, %v255
        %v276 = vmax.f32 %v235, %v256
        %v277 = vmax.f32 %v236, %v257
        %v278 = vmax.f32 %v237, %v258
        %v279 = vmax.f32 %v238, %v259
        %v280 = vmax.f32 %v239, %v260
        %v281 = vmax.f32 %v240, %v261
        %v282 = vmax.f32 %v241, %v262
        %v283 = vmax.f32 %v242, %v263
        %v284 = vmax.f32 %v243, %v264
        %v285 = vmax.f32 %v244, %v265
        %v286 = vmax.f32 %v245, %v266
        %v287 = vmax.f32 %v246, %v267
        %v288 = vmax.f32 %v247, %v268
        %s289 = scalar_lea.vmem %s226, 320
        %v290 = vld [vmem:[%s289] sm:$0xff]
        %v291 = vld [vmem:[%s289 + $0x8] sm:$0x3]
        %v292 = vld [vmem:[%s289 + $0x10] sm:$0xff]
        %v293 = vld [vmem:[%s289 + $0x18] sm:$0x3]
        %v294 = vld [vmem:[%s289 + $0x20] sm:$0xff]
        %v295 = vld [vmem:[%s289 + $0x28] sm:$0x3]
        %v296 = vld [vmem:[%s289 + $0x30] sm:$0xff]
        %v297 = vld [vmem:[%s289 + $0x38] sm:$0x3]
        %v298 = vld [vmem:[%s289 + $0x40] sm:$0xff]
        %v299 = vld [vmem:[%s289 + $0x48] sm:$0x3]
        %v300 = vld [vmem:[%s289 + $0x50] sm:$0xff]
        %v301 = vld [vmem:[%s289 + $0x58] sm:$0x3]
        %v302 = vld [vmem:[%s289 + $0x60] sm:$0xff]
        %v303 = vld [vmem:[%s289 + $0x68] sm:$0x3]
        %v304 = vld [vmem:[%s289 + $0x70] sm:$0xff]
        %v305 = vld [vmem:[%s289 + $0x78] sm:$0x3]
        %v306 = vld [vmem:[%s289 + $0x80] sm:$0xff]
        %v307 = vld [vmem:[%s289 + $0x88] sm:$0x3]
        %v308 = vld [vmem:[%s289 + $0x90] sm:$0xff]
        %v309 = vld [vmem:[%s289 + $0x98] sm:$0x3]
        %s310 = scalar_lea.vmem %s226, 480
        %v311 = vld [vmem:[%s310] sm:$0xff]
        %v312 = vld [vmem:[%s310 + $0x8] sm:$0x3]
        %v313 = vld [vmem:[%s310 + $0x10] sm:$0xff]
        %v314 = vld [vmem:[%s310 + $0x18] sm:$0x3]
        %v315 = vld [vmem:[%s310 + $0x20] sm:$0xff]
        %v316 = vld [vmem:[%s310 + $0x28] sm:$0x3]
        %v317 = vld [vmem:[%s310 + $0x30] sm:$0xff]
        %v318 = vld [vmem:[%s310 + $0x38] sm:$0x3]
        %v319 = vld [vmem:[%s310 + $0x40] sm:$0xff]
        %v320 = vld [vmem:[%s310 + $0x48] sm:$0x3]
        %v321 = vld [vmem:[%s310 + $0x50] sm:$0xff]
        %v322 = vld [vmem:[%s310 + $0x58] sm:$0x3]
        %v323 = vld [vmem:[%s310 + $0x60] sm:$0xff]
        %v324 = vld [vmem:[%s310 + $0x68] sm:$0x3]
        %v325 = vld [vmem:[%s310 + $0x70] sm:$0xff]
        %v326 = vld [vmem:[%s310 + $0x78] sm:$0x3]
        %v327 = vld [vmem:[%s310 + $0x80] sm:$0xff]
        %v328 = vld [vmem:[%s310 + $0x88] sm:$0x3]
        %v329 = vld [vmem:[%s310 + $0x90] sm:$0xff]
        %v330 = vld [vmem:[%s310 + $0x98] sm:$0x3]
        %v331 = vmax.f32 %v290, %v311
        %v332 = vmax.f32 %v291, %v312
        %v333 = vmax.f32 %v292, %v313
        %v334 = vmax.f32 %v293, %v314
        %v335 = vmax.f32 %v294, %v315
        %v336 = vmax.f32 %v295, %v316
        %v337 = vmax.f32 %v296, %v317
        %v338 = vmax.f32 %v297, %v318
        %v339 = vmax.f32 %v298, %v319
        %v340 = vmax.f32 %v299, %v320
        %v341 = vmax.f32 %v300, %v321
        %v342 = vmax.f32 %v301, %v322
        %v343 = vmax.f32 %v302, %v323
        %v344 = vmax.f32 %v303, %v324
        %v345 = vmax.f32 %v304, %v325
        %v346 = vmax.f32 %v305, %v326
        %v347 = vmax.f32 %v306, %v327
        %v348 = vmax.f32 %v307, %v328
        %v349 = vmax.f32 %v308, %v329
        %v350 = vmax.f32 %v309, %v330
        %v351 = vmax.f32 %v269, %v331
        %v352 = vmax.f32 %v270, %v332
        %v353 = vmax.f32 %v271, %v333
        %v354 = vmax.f32 %v272, %v334
        %v355 = vmax.f32 %v273, %v335
        %v356 = vmax.f32 %v274, %v336
        %v357 = vmax.f32 %v275, %v337
        %v358 = vmax.f32 %v276, %v338
        %v359 = vmax.f32 %v277, %v339
        %v360 = vmax.f32 %v278, %v340
        %v361 = vmax.f32 %v279, %v341
        %v362 = vmax.f32 %v280, %v342
        %v363 = vmax.f32 %v281, %v343
        %v364 = vmax.f32 %v282, %v344
        %v365 = vmax.f32 %v283, %v345
        %v366 = vmax.f32 %v284, %v346
        %v367 = vmax.f32 %v285, %v347
        %v368 = vmax.f32 %v286, %v348
        %v369 = vmax.f32 %v287, %v349
        %v370 = vmax.f32 %v288, %v350
        %vm371 = vcmask 31744
        %372 = vst.msk [vmem:[#allocation2] sm:$0xff] %vm371, %v351
        %373 = vst.msk [vmem:[#allocation2 + $0x8] sm:$0xff] %vm371, %v353
        %374 = vst.msk [vmem:[#allocation2 + $0x10] sm:$0xff] %vm371, %v355
        %375 = vst.msk [vmem:[#allocation2 + $0x18] sm:$0xff] %vm371, %v357
        %376 = vst.msk [vmem:[#allocation2 + $0x20] sm:$0xff] %vm371, %v359
        %377 = vst.msk [vmem:[#allocation2 + $0x28] sm:$0xff] %vm371, %v361
        %378 = vst.msk [vmem:[#allocation2 + $0x30] sm:$0xff] %vm371, %v363
        %379 = vst.msk [vmem:[#allocation2 + $0x38] sm:$0xff] %vm371, %v365
        %vm396 = vcmask 1046528
        %v397 = vrot.slane %v351, 1
        %v398 = vrot.slane %v352, 1
        %v399 = vsel %vm396, %v397, %v398
        %v400 = vrot.slane %v353, 1
        %v401 = vrot.slane %v354, 1
        %v402 = vsel %vm396, %v400, %v401
        %v403 = vrot.slane %v355, 1
        %v404 = vrot.slane %v356, 1
        %v405 = vsel %vm396, %v403, %v404
        %v406 = vrot.slane %v357, 1
        %v407 = vrot.slane %v358, 1
        %v408 = vsel %vm396, %v406, %v407
        %v409 = vrot.slane %v359, 1
        %v410 = vrot.slane %v360, 1
        %v411 = vsel %vm396, %v409, %v410
        %v412 = vrot.slane %v361, 1
        %v413 = vrot.slane %v362, 1
        %v414 = vsel %vm396, %v412, %v413
        %v415 = vrot.slane %v363, 1
        %v416 = vrot.slane %v364, 1
        %v417 = vsel %vm396, %v415, %v416
        %v418 = vrot.slane %v365, 1
        %v419 = vrot.slane %v366, 1
        %v420 = vsel %vm396, %v418, %v419
        %421 = vrot.lane.b32.xlu0 %v399, 4
        %v422 = vpop.permute.xlu0 %421
        %423 = vrot.lane.b32.xlu0 %v402, 4
        %v424 = vpop.permute.xlu0 %423
        %425 = vrot.lane.b32.xlu0 %v405, 4
        %v426 = vpop.permute.xlu0 %425
        %427 = vrot.lane.b32.xlu0 %v408, 4
        %v428 = vpop.permute.xlu0 %427
        %429 = vrot.lane.b32.xlu0 %v411, 4
        %v430 = vpop.permute.xlu0 %429
        %431 = vrot.lane.b32.xlu0 %v414, 4
        %v432 = vpop.permute.xlu0 %431
        %433 = vrot.lane.b32.xlu0 %v417, 4
        %v434 = vpop.permute.xlu0 %433
        %435 = vrot.lane.b32.xlu0 %v420, 4
        %v436 = vpop.permute.xlu0 %435
        %vm445 = vcmask 64544
        %446 = vst.msk [vmem:[#allocation2] sm:$0xff] %vm445, %v422
        %447 = vst.msk [vmem:[#allocation2 + $0x8] sm:$0xff] %vm445, %v424
        %448 = vst.msk [vmem:[#allocation2 + $0x10] sm:$0xff] %vm445, %v426
        %449 = vst.msk [vmem:[#allocation2 + $0x18] sm:$0xff] %vm445, %v428
        %450 = vst.msk [vmem:[#allocation2 + $0x20] sm:$0xff] %vm445, %v430
        %451 = vst.msk [vmem:[#allocation2 + $0x28] sm:$0xff] %vm445, %v432
        %452 = vst.msk [vmem:[#allocation2 + $0x30] sm:$0xff] %vm445, %v434
        %453 = vst.msk [vmem:[#allocation2 + $0x38] sm:$0xff] %vm445, %v436
        %vm454 = vcmask 1045504
        %v455 = vrot.slane %v351, 2
        %v456 = vrot.slane %v352, 2
        %v457 = vsel %vm454, %v455, %v456
        %v458 = vrot.slane %v353, 2
        %v459 = vrot.slane %v354, 2
        %v460 = vsel %vm454, %v458, %v459
        %v461 = vrot.slane %v355, 2
        %v462 = vrot.slane %v356, 2
        %v463 = vsel %vm454, %v461, %v462
        %v464 = vrot.slane %v357, 2
        %v465 = vrot.slane %v358, 2
        %v466 = vsel %vm454, %v464, %v465
        %v467 = vrot.slane %v359, 2
        %v468 = vrot.slane %v360, 2
        %v469 = vsel %vm454, %v467, %v468
        %v470 = vrot.slane %v361, 2
        %v471 = vrot.slane %v362, 2
        %v472 = vsel %vm454, %v470, %v471
        %v473 = vrot.slane %v363, 2
        %v474 = vrot.slane %v364, 2
        %v475 = vsel %vm454, %v473, %v474
        %v476 = vrot.slane %v365, 2
        %v477 = vrot.slane %v366, 2
        %v478 = vsel %vm454, %v476, %v477
        %479 = vrot.lane.b32.xlu0 %v457, 8
        %v480 = vpop.permute.xlu0 %479
        %481 = vrot.lane.b32.xlu0 %v460, 8
        %v482 = vpop.permute.xlu0 %481
        %483 = vrot.lane.b32.xlu0 %v463, 8
        %v484 = vpop.permute.xlu0 %483
        %485 = vrot.lane.b32.xlu0 %v466, 8
        %v486 = vpop.permute.xlu0 %485
        %487 = vrot.lane.b32.xlu0 %v469, 8
        %v488 = vpop.permute.xlu0 %487
        %489 = vrot.lane.b32.xlu0 %v472, 8
        %v490 = vpop.permute.xlu0 %489
        %491 = vrot.lane.b32.xlu0 %v475, 8
        %v492 = vpop.permute.xlu0 %491
        %493 = vrot.lane.b32.xlu0 %v478, 8
        %v494 = vpop.permute.xlu0 %493
        %vm503 = vcmask 97344
        %504 = vst.msk [vmem:[#allocation2] sm:$0xff] %vm503, %v480
        %505 = vst.msk [vmem:[#allocation2 + $0x8] sm:$0xff] %vm503, %v482
        %506 = vst.msk [vmem:[#allocation2 + $0x10] sm:$0xff] %vm503, %v484
        %507 = vst.msk [vmem:[#allocation2 + $0x18] sm:$0xff] %vm503, %v486
        %508 = vst.msk [vmem:[#allocation2 + $0x20] sm:$0xff] %vm503, %v488
        %509 = vst.msk [vmem:[#allocation2 + $0x28] sm:$0xff] %vm503, %v490
        %510 = vst.msk [vmem:[#allocation2 + $0x30] sm:$0xff] %vm503, %v492
        %511 = vst.msk [vmem:[#allocation2 + $0x38] sm:$0xff] %vm503, %v494
        %513 = vrot.lane.b32.xlu0 %v353, 12
        %v514 = vpop.permute.xlu0 %513
        %515 = vrot.lane.b32.xlu0 %v355, 12
        %v516 = vpop.permute.xlu0 %515
        %517 = vrot.lane.b32.xlu0 %v357, 12
        %v518 = vpop.permute.xlu0 %517
        %519 = vrot.lane.b32.xlu0 %v359, 12
        %v520 = vpop.permute.xlu0 %519
        %521 = vrot.lane.b32.xlu0 %v361, 12
        %v522 = vpop.permute.xlu0 %521
        %523 = vrot.lane.b32.xlu0 %v363, 12
        %v524 = vpop.permute.xlu0 %523
        %525 = vrot.lane.b32.xlu0 %v365, 12
        %v526 = vpop.permute.xlu0 %525
        %527 = vrot.lane.b32.xlu0 %v367, 12
        %v528 = vpop.permute.xlu0 %527
        %vm537 = vcmask 130144
        %538 = vst.msk [vmem:[#allocation2] sm:$0xff] %vm537, %v514
        %539 = vst.msk [vmem:[#allocation2 + $0x8] sm:$0xff] %vm537, %v516
        %540 = vst.msk [vmem:[#allocation2 + $0x10] sm:$0xff] %vm537, %v518
        %541 = vst.msk [vmem:[#allocation2 + $0x18] sm:$0xff] %vm537, %v520
        %542 = vst.msk [vmem:[#allocation2 + $0x20] sm:$0xff] %vm537, %v522
        %543 = vst.msk [vmem:[#allocation2 + $0x28] sm:$0xff] %vm537, %v524
        %544 = vst.msk [vmem:[#allocation2 + $0x30] sm:$0xff] %vm537, %v526
        %545 = vst.msk [vmem:[#allocation2 + $0x38] sm:$0xff] %vm537, %v528
        %v547 = vrot.slane %v367, 1
        %v548 = vrot.slane %v368, 1
        %v549 = vsel %vm396, %v547, %v548
        %550 = vrot.lane.b32.xlu0 %v402, 16
        %v551 = vpop.permute.xlu0 %550
        %552 = vrot.lane.b32.xlu0 %v405, 16
        %v553 = vpop.permute.xlu0 %552
        %554 = vrot.lane.b32.xlu0 %v408, 16
        %v555 = vpop.permute.xlu0 %554
        %556 = vrot.lane.b32.xlu0 %v411, 16
        %v557 = vpop.permute.xlu0 %556
        %558 = vrot.lane.b32.xlu0 %v414, 16
        %v559 = vpop.permute.xlu0 %558
        %560 = vrot.lane.b32.xlu0 %v417, 16
        %v561 = vpop.permute.xlu0 %560
        %562 = vrot.lane.b32.xlu0 %v420, 16
        %v563 = vpop.permute.xlu0 %562
        %564 = vrot.lane.b32.xlu0 %v549, 16
        %v565 = vpop.permute.xlu0 %564
        %vm574 = vcmask 162944
        %575 = vst.msk [vmem:[#allocation2] sm:$0xff] %vm574, %v551
        %576 = vst.msk [vmem:[#allocation2 + $0x8] sm:$0xff] %vm574, %v553
        %577 = vst.msk [vmem:[#allocation2 + $0x10] sm:$0xff] %vm574, %v555
        %578 = vst.msk [vmem:[#allocation2 + $0x18] sm:$0xff] %vm574, %v557
        %579 = vst.msk [vmem:[#allocation2 + $0x20] sm:$0xff] %vm574, %v559
        %580 = vst.msk [vmem:[#allocation2 + $0x28] sm:$0xff] %vm574, %v561
        %581 = vst.msk [vmem:[#allocation2 + $0x30] sm:$0xff] %vm574, %v563
        %582 = vst.msk [vmem:[#allocation2 + $0x38] sm:$0xff] %vm574, %v565
        %v583 = vrot.slane %v367, 2
        %v584 = vrot.slane %v368, 2
        %v585 = vsel %vm454, %v583, %v584
        %586 = vrot.lane.b32.xlu0 %v460, 20
        %v587 = vpop.permute.xlu0 %586
        %588 = vrot.lane.b32.xlu0 %v463, 20
        %v589 = vpop.permute.xlu0 %588
        %590 = vrot.lane.b32.xlu0 %v466, 20
        %v591 = vpop.permute.xlu0 %590
        %592 = vrot.lane.b32.xlu0 %v469, 20
        %v593 = vpop.permute.xlu0 %592
        %594 = vrot.lane.b32.xlu0 %v472, 20
        %v595 = vpop.permute.xlu0 %594
        %596 = vrot.lane.b32.xlu0 %v475, 20
        %v597 = vpop.permute.xlu0 %596
        %598 = vrot.lane.b32.xlu0 %v478, 20
        %v599 = vpop.permute.xlu0 %598
        %600 = vrot.lane.b32.xlu0 %v585, 20
        %v601 = vpop.permute.xlu0 %600
        %vm610 = vcmask 195744
        %611 = vst.msk [vmem:[#allocation2] sm:$0xff] %vm610, %v587
        %612 = vst.msk [vmem:[#allocation2 + $0x8] sm:$0xff] %vm610, %v589
        %613 = vst.msk [vmem:[#allocation2 + $0x10] sm:$0xff] %vm610, %v591
        %614 = vst.msk [vmem:[#allocation2 + $0x18] sm:$0xff] %vm610, %v593
        %615 = vst.msk [vmem:[#allocation2 + $0x20] sm:$0xff] %vm610, %v595
        %616 = vst.msk [vmem:[#allocation2 + $0x28] sm:$0xff] %vm610, %v597
        %617 = vst.msk [vmem:[#allocation2 + $0x30] sm:$0xff] %vm610, %v599
        %618 = vst.msk [vmem:[#allocation2 + $0x38] sm:$0xff] %vm610, %v601
        %620 = vrot.lane.b32.xlu0 %v355, 24
        %v621 = vpop.permute.xlu0 %620
        %622 = vrot.lane.b32.xlu0 %v357, 24
        %v623 = vpop.permute.xlu0 %622
        %624 = vrot.lane.b32.xlu0 %v359, 24
        %v625 = vpop.permute.xlu0 %624
        %626 = vrot.lane.b32.xlu0 %v361, 24
        %v627 = vpop.permute.xlu0 %626
        %628 = vrot.lane.b32.xlu0 %v363, 24
        %v629 = vpop.permute.xlu0 %628
        %630 = vrot.lane.b32.xlu0 %v365, 24
        %v631 = vpop.permute.xlu0 %630
        %632 = vrot.lane.b32.xlu0 %v367, 24
        %v633 = vpop.permute.xlu0 %632
        %634 = vrot.lane.b32.xlu0 %v369, 24
        %v635 = vpop.permute.xlu0 %634
        %vm644 = vcmask 228544
        %645 = vst.msk [vmem:[#allocation2] sm:$0xff] %vm644, %v621
        %646 = vst.msk [vmem:[#allocation2 + $0x8] sm:$0xff] %vm644, %v623
        %647 = vst.msk [vmem:[#allocation2 + $0x10] sm:$0xff] %vm644, %v625
        %648 = vst.msk [vmem:[#allocation2 + $0x18] sm:$0xff] %vm644, %v627
        %649 = vst.msk [vmem:[#allocation2 + $0x20] sm:$0xff] %vm644, %v629
        %650 = vst.msk [vmem:[#allocation2 + $0x28] sm:$0xff] %vm644, %v631
        %651 = vst.msk [vmem:[#allocation2 + $0x30] sm:$0xff] %vm644, %v633
        %652 = vst.msk [vmem:[#allocation2 + $0x38] sm:$0xff] %vm644, %v635
        %v654 = vrot.slane %v369, 1
        %v655 = vrot.slane %v370, 1
        %v656 = vsel %vm396, %v654, %v655
        %657 = vrot.lane.b32.xlu0 %v405, 28
        %v658 = vpop.permute.xlu0 %657
        %659 = vrot.lane.b32.xlu0 %v408, 28
        %v660 = vpop.permute.xlu0 %659
        %661 = vrot.lane.b32.xlu0 %v411, 28
        %v662 = vpop.permute.xlu0 %661
        %663 = vrot.lane.b32.xlu0 %v414, 28
        %v664 = vpop.permute.xlu0 %663
        %665 = vrot.lane.b32.xlu0 %v417, 28
        %v666 = vpop.permute.xlu0 %665
        %667 = vrot.lane.b32.xlu0 %v420, 28
        %v668 = vpop.permute.xlu0 %667
        %669 = vrot.lane.b32.xlu0 %v549, 28
        %v670 = vpop.permute.xlu0 %669
        %671 = vrot.lane.b32.xlu0 %v656, 28
        %v672 = vpop.permute.xlu0 %671
        %vm681 = vcmask 261344
        %682 = vst.msk [vmem:[#allocation2] sm:$0xff] %vm681, %v658
        %683 = vst.msk [vmem:[#allocation2 + $0x8] sm:$0xff] %vm681, %v660
        %684 = vst.msk [vmem:[#allocation2 + $0x10] sm:$0xff] %vm681, %v662
        %685 = vst.msk [vmem:[#allocation2 + $0x18] sm:$0xff] %vm681, %v664
        %686 = vst.msk [vmem:[#allocation2 + $0x20] sm:$0xff] %vm681, %v666
        %687 = vst.msk [vmem:[#allocation2 + $0x28] sm:$0xff] %vm681, %v668
        %688 = vst.msk [vmem:[#allocation2 + $0x30] sm:$0xff] %vm681, %v670
        %689 = vst.msk [vmem:[#allocation2 + $0x38] sm:$0xff] %vm681, %v672
        %v690 = vrot.slane %v369, 2
        %v691 = vrot.slane %v370, 2
        %v692 = vsel %vm454, %v690, %v691
        %693 = vrot.lane.b32.xlu0 %v463, 32
        %v694 = vpop.permute.xlu0 %693
        %695 = vrot.lane.b32.xlu0 %v466, 32
        %v696 = vpop.permute.xlu0 %695
        %697 = vrot.lane.b32.xlu0 %v469, 32
        %v698 = vpop.permute.xlu0 %697
        %699 = vrot.lane.b32.xlu0 %v472, 32
        %v700 = vpop.permute.xlu0 %699
        %701 = vrot.lane.b32.xlu0 %v475, 32
        %v702 = vpop.permute.xlu0 %701
        %703 = vrot.lane.b32.xlu0 %v478, 32
        %v704 = vpop.permute.xlu0 %703
        %705 = vrot.lane.b32.xlu0 %v585, 32
        %v706 = vpop.permute.xlu0 %705
        %707 = vrot.lane.b32.xlu0 %v692, 32
        %v708 = vpop.permute.xlu0 %707
        %vm717 = vcmask 294144
        %718 = vst.msk [vmem:[#allocation2] sm:$0xff] %vm717, %v694
        %719 = vst.msk [vmem:[#allocation2 + $0x8] sm:$0xff] %vm717, %v696
        %720 = vst.msk [vmem:[#allocation2 + $0x10] sm:$0xff] %vm717, %v698
        %721 = vst.msk [vmem:[#allocation2 + $0x18] sm:$0xff] %vm717, %v700
        %722 = vst.msk [vmem:[#allocation2 + $0x20] sm:$0xff] %vm717, %v702
        %723 = vst.msk [vmem:[#allocation2 + $0x28] sm:$0xff] %vm717, %v704
        %724 = vst.msk [vmem:[#allocation2 + $0x30] sm:$0xff] %vm717, %v706
        %725 = vst.msk [vmem:[#allocation2 + $0x38] sm:$0xff] %vm717, %v708
        %v726 = vld [vmem:[#allocation2] sm:$0xff]
        %v727 = vld [vmem:[#allocation2 + $0x8] sm:$0xff]
        %v728 = vld [vmem:[#allocation2 + $0x10] sm:$0xff]
        %v729 = vld [vmem:[#allocation2 + $0x18] sm:$0xff]
        %v730 = vld [vmem:[#allocation2 + $0x20] sm:$0xff]
        %v731 = vld [vmem:[#allocation2 + $0x28] sm:$0xff]
        %v732 = vld [vmem:[#allocation2 + $0x30] sm:$0xff]
        %v733 = vld [vmem:[#allocation2 + $0x38] sm:$0xff]
        %v734 = vld [vmem:[%s1] sm:$0xff]
        %v735 = vld [vmem:[%s1 + $0x8] sm:$0xff]
        %v736 = vld [vmem:[%s1 + $0x10] sm:$0xff]
        %v737 = vld [vmem:[%s1 + $0x18] sm:$0xff]
        %v738 = vld [vmem:[%s1 + $0x20] sm:$0xf]
        %v739 = vld [vmem:[%s2] sm:$0x1]
        %v741 = vlaneseq
        %v742 = vshrl.u32 %v741, 7
        %v743 = vsub.s32 0, %v742
        %v744 = vrot.slane %v739, %v743
        %vm746 = vcmask 293888
        %v748 = vsel %vm746, %v726, 0
        %v751 = vsel %vm746, %v727, 0
        %v754 = vsel %vm746, %v728, 0
        %v757 = vsel %vm746, %v729, 0
        %v760 = vsel %vm746, %v730, 0
        %v763 = vsel %vm746, %v731, 0
        %v766 = vsel %vm746, %v732, 0
        %v769 = vsel %vm746, %v733, 0
        %vm771 = vcmask 1043456
        %v773 = vsel %vm771, %v738, 0
        %775 = vmatprep.subr.mxu0 0.0
        %776 = vmatpush1.msra.mxu0 %v734
        %777 = vmatprep.subr.mxu0 0.0
        %778 = vmatpush1.msra.mxu0 %v735
        %779 = vmatprep.subr.mxu0 0.0
        %780 = vmatpush1.msra.mxu0 %v736
        %781 = vmatprep.subr.mxu0 0.0
        %782 = vmatpush1.msra.mxu0 %v737
        %783 = vmatprep.subr.mxu0 0.0
        %784 = vmatpush1.msra.mxu0 %v773
        %785 = vmatprep.subr.mxu0 0.0
        %786 = vmatpush1.msra.mxu0 0.0
        %787 = vmatprep.subr.mxu0 0.0
        %788 = vmatpush1.msra.mxu0 0.0
        %789 = vmatprep.subr.mxu0 0.0
        %790 = vmatpush1.msra.mxu0 0.0
        %791 = vmatprep.subr.mxu0 0.0
        %792 = vmatpush1.msra.mxu0 0.0
        %793 = vmatprep.subr.mxu0 0.0
        %794 = vmatpush1.msra.mxu0 0.0
        %795 = vmatprep.subr.mxu0 0.0
        %796 = vmatpush1.msra.mxu0 0.0
        %797 = vmatprep.subr.mxu0 0.0
        %798 = vmatpush1.msra.mxu0 0.0
        %799 = vmatprep.subr.mxu0 0.0
        %800 = vmatpush1.msra.mxu0 0.0
        %801 = vmatprep.subr.mxu0 0.0
        %802 = vmatpush1.msra.mxu0 0.0
        %803 = vmatprep.subr.mxu0 0.0
        %804 = vmatpush1.msra.mxu0 0.0
        %805 = vmatprep.subr.mxu0 0.0
        %806 = vmatpush1.msra.mxu0 0.0
        %807 = vmatprep.subr.mxu0 0.0
        %808 = vmatpush1.msra.mxu0 0.0
        %809 = vmatprep.subr.mxu0 0.0
        %810 = vmatpush1.msra.mxu0 0.0
        %811 = vmatprep.subr.mxu0 0.0
        %812 = vmatpush1.msra.mxu0 0.0
        %813 = vmatprep.subr.mxu0 0.0
        %814 = vmatpush1.msra.mxu0 0.0
        %815 = vmatprep.subr.mxu0 0.0
        %816 = vmatpush1.msra.mxu0 0.0
        %817 = vmatprep.subr.mxu0 0.0
        %818 = vmatpush1.msra.mxu0 0.0
        %819 = vmatprep.subr.mxu0 0.0
        %820 = vmatpush1.msra.mxu0 0.0
        %821 = vmatprep.subr.mxu0 0.0
        %822 = vmatpush1.msra.mxu0 0.0
        %823 = vmatprep.subr.mxu0 0.0
        %824 = vmatpush1.msra.mxu0 0.0
        %825 = vmatprep.subr.mxu0 0.0
        %826 = vmatpush1.msra.mxu0 0.0
        %827 = vmatprep.subr.mxu0 0.0
        %828 = vmatpush1.msra.mxu0 0.0
        %829 = vmatprep.subr.mxu0 0.0
        %830 = vmatpush1.msra.mxu0 0.0
        %831 = vmatprep.subr.mxu0 0.0
        %832 = vmatpush1.msra.mxu0 0.0
        %833 = vmatprep.subr.mxu0 0.0
        %834 = vmatpush1.msra.mxu0 0.0
        %835 = vmatprep.subr.mxu0 0.0
        %836 = vmatpush1.msra.mxu0 0.0
        %837 = vmatprep.subr.mxu0 0.0
        %838 = vmatpush1.msra.mxu0 0.0
        %839 = vmatprep.mubr.f32.mxu0 0.0
        %840 = vmatmul.mubr.f32.gmra.mrb[0].mxu0 %v748
        %v841 = vpop.f32.mrb[0].mxu0
        %v842 = vadd.f32 %v744, %v841
        %v843 = vpop.f32.mrb[0].mxu0
        %844 = vmatprep.mubr.f32.mxu0 0.0
        %845 = vmatmul.mubr.f32.gmra.mrb[0].mxu0 %v751
        %v846 = vpop.f32.mrb[0].mxu0
        %v847 = vadd.f32 %v744, %v846
        %v848 = vpop.f32.mrb[0].mxu0
        %849 = vmatprep.mubr.f32.mxu0 0.0
        %850 = vmatmul.mubr.f32.gmra.mrb[0].mxu0 %v754
        %v851 = vpop.f32.mrb[0].mxu0
        %v852 = vadd.f32 %v744, %v851
        %v853 = vpop.f32.mrb[0].mxu0
        %854 = vmatprep.mubr.f32.mxu0 0.0
        %855 = vmatmul.mubr.f32.gmra.mrb[0].mxu0 %v757
        %v856 = vpop.f32.mrb[0].mxu0
        %v857 = vadd.f32 %v744, %v856
        %v858 = vpop.f32.mrb[0].mxu0
        %859 = vmatprep.mubr.f32.mxu0 0.0
        %860 = vmatmul.mubr.f32.gmra.mrb[0].mxu0 %v760
        %v861 = vpop.f32.mrb[0].mxu0
        %v862 = vadd.f32 %v744, %v861
        %v863 = vpop.f32.mrb[0].mxu0
        %864 = vmatprep.mubr.f32.mxu0 0.0
        %865 = vmatmul.mubr.f32.gmra.mrb[0].mxu0 %v763
        %v866 = vpop.f32.mrb[0].mxu0
        %v867 = vadd.f32 %v744, %v866
        %v868 = vpop.f32.mrb[0].mxu0
        %869 = vmatprep.mubr.f32.mxu0 0.0
        %870 = vmatmul.mubr.f32.gmra.mrb[0].mxu0 %v766
        %v871 = vpop.f32.mrb[0].mxu0
        %v872 = vadd.f32 %v744, %v871
        %v873 = vpop.f32.mrb[0].mxu0
        %874 = vmatprep.mubr.f32.mxu0 0.0
        %875 = vmatmul.mubr.f32.gmra.mrb[0].mxu0 %v769
        %v876 = vpop.f32.mrb[0].mxu0
        %v877 = vadd.f32 %v744, %v876
        %v878 = vpop.f32.mrb[0].mxu0
        %879 = vdwg.mxu0
        %vm880 = vcmp.gt.f32.partialorder %v842, 0.0
        %vm881 = vcmp.gt.f32.partialorder %v847, 0.0
        %vm882 = vcmp.gt.f32.partialorder %v852, 0.0
        %vm883 = vcmp.gt.f32.partialorder %v857, 0.0
        %vm884 = vcmp.gt.f32.partialorder %v862, 0.0
        %vm885 = vcmp.gt.f32.partialorder %v867, 0.0
        %vm886 = vcmp.gt.f32.partialorder %v872, 0.0
        %vm887 = vcmp.gt.f32.partialorder %v877, 0.0
        %v888 = vmul.f32 %v842, 0.2
        %v889 = vmul.f32 %v847, 0.2
        %v890 = vmul.f32 %v852, 0.2
        %v891 = vmul.f32 %v857, 0.2
        %v892 = vmul.f32 %v862, 0.2
        %v893 = vmul.f32 %v867, 0.2
        %v894 = vmul.f32 %v872, 0.2
        %v895 = vmul.f32 %v877, 0.2
        %v896 = vsel %vm880, %v842, %v888
        %v897 = vsel %vm881, %v847, %v889
        %v898 = vsel %vm882, %v852, %v890
        %v899 = vsel %vm883, %v857, %v891
        %v900 = vsel %vm884, %v862, %v892
        %v901 = vsel %vm885, %v867, %v893
        %v902 = vsel %vm886, %v872, %v894
        %v903 = vsel %vm887, %v877, %v895
        %vm904 = vcmask 64512
        %905 = vst.msk [vmem:[#allocation3] sm:$0xff] %vm904, 0.0
        %vm906 = vcmask 58368
        %907 = vst.msk [vmem:[#allocation3 + $0x8] sm:$0x3] %vm906, 0.0
        %908 = vst.msk [vmem:[#allocation3 + $0x10] sm:$0xff] %vm904, 0.0
        %909 = vst.msk [vmem:[#allocation3 + $0x18] sm:$0x3] %vm906, 0.0
        %910 = vst.msk [vmem:[#allocation3 + $0x20] sm:$0xff] %vm904, 0.0
        %911 = vst.msk [vmem:[#allocation3 + $0x28] sm:$0x3] %vm906, 0.0
        %912 = vst.msk [vmem:[#allocation3 + $0x30] sm:$0xff] %vm904, 0.0
        %913 = vst.msk [vmem:[#allocation3 + $0x38] sm:$0x3] %vm906, 0.0
        %914 = vst.msk [vmem:[#allocation3 + $0x40] sm:$0xff] %vm904, 0.0
        %915 = vst.msk [vmem:[#allocation3 + $0x48] sm:$0x3] %vm906, 0.0
        %916 = vst.msk [vmem:[#allocation3 + $0x50] sm:$0xff] %vm904, 0.0
        %917 = vst.msk [vmem:[#allocation3 + $0x58] sm:$0x3] %vm906, 0.0
        %918 = vst.msk [vmem:[#allocation3 + $0x60] sm:$0xff] %vm904, 0.0
        %919 = vst.msk [vmem:[#allocation3 + $0x68] sm:$0x3] %vm906, 0.0
        %920 = vst.msk [vmem:[#allocation3 + $0x70] sm:$0xff] %vm904, 0.0
        %921 = vst.msk [vmem:[#allocation3 + $0x78] sm:$0x3] %vm906, 0.0
        %922 = vst.msk [vmem:[#allocation3 + $0x80] sm:$0xff] %vm904, 0.0
        %923 = vst.msk [vmem:[#allocation3 + $0x88] sm:$0x3] %vm906, 0.0
        %924 = vst.msk [vmem:[#allocation3 + $0x90] sm:$0xff] %vm904, 0.0
        %925 = vst.msk [vmem:[#allocation3 + $0x98] sm:$0x3] %vm906, 0.0
        %s926 = scalar_lea.vmem [#allocation3], 16
        %927 = vst.msk [vmem:[%s926 + $0x1] sm:$0xff] %vm904, %v896
        %928 = vst.msk [vmem:[%s926 + $0x11] sm:$0xff] %vm904, %v897
        %929 = vst.msk [vmem:[%s926 + $0x21] sm:$0xff] %vm904, %v898
        %930 = vst.msk [vmem:[%s926 + $0x31] sm:$0xff] %vm904, %v899
        %931 = vst.msk [vmem:[%s926 + $0x41] sm:$0xff] %vm904, %v900
        %932 = vst.msk [vmem:[%s926 + $0x51] sm:$0xff] %vm904, %v901
        %933 = vst.msk [vmem:[%s926 + $0x61] sm:$0xff] %vm904, %v902
        %934 = vst.msk [vmem:[%s926 + $0x71] sm:$0xff] %vm904, %v903
        %v935 = vld [vmem:[#allocation3] sm:$0xff]
        %v936 = vld [vmem:[#allocation3 + $0x10] sm:$0xff]
        %v937 = vld [vmem:[#allocation3 + $0x20] sm:$0xff]
        %v938 = vld [vmem:[#allocation3 + $0x30] sm:$0xff]
        %v939 = vld [vmem:[#allocation3 + $0x40] sm:$0xff]
        %v940 = vld [vmem:[#allocation3 + $0x50] sm:$0xff]
        %v941 = vld [vmem:[#allocation3 + $0x60] sm:$0xff]
        %v942 = vld [vmem:[#allocation3 + $0x70] sm:$0xff]
        %943 = vst.msk [vmem:[#allocation4] sm:$0xff] %vm904, %v935
        %944 = vst.msk [vmem:[#allocation4 + $0x8] sm:$0xff] %vm904, %v936
        %945 = vst.msk [vmem:[#allocation4 + $0x10] sm:$0xff] %vm904, %v937
        %946 = vst.msk [vmem:[#allocation4 + $0x18] sm:$0xff] %vm904, %v938
        %947 = vst.msk [vmem:[#allocation4 + $0x20] sm:$0xff] %vm904, %v939
        %948 = vst.msk [vmem:[#allocation4 + $0x28] sm:$0xff] %vm904, %v940
        %949 = vst.msk [vmem:[#allocation4 + $0x30] sm:$0xff] %vm904, %v941
        %950 = vst.msk [vmem:[#allocation4 + $0x38] sm:$0xff] %vm904, %v942
        %v951 = vld [vmem:[#allocation3 + $0x1] sm:$0xff]
        %v952 = vld [vmem:[#allocation3 + $0x11] sm:$0xff]
        %v953 = vld [vmem:[#allocation3 + $0x21] sm:$0xff]
        %v954 = vld [vmem:[#allocation3 + $0x31] sm:$0xff]
        %v955 = vld [vmem:[#allocation3 + $0x41] sm:$0xff]
        %v956 = vld [vmem:[#allocation3 + $0x51] sm:$0xff]
        %v957 = vld [vmem:[#allocation3 + $0x61] sm:$0xff]
        %v958 = vld [vmem:[#allocation3 + $0x71] sm:$0xff]
        %967 = vrot.lane.b32.xlu0 %v951, 8
        %v968 = vpop.permute.xlu0 %967
        %969 = vrot.lane.b32.xlu0 %v952, 8
        %v970 = vpop.permute.xlu0 %969
        %971 = vrot.lane.b32.xlu0 %v953, 8
        %v972 = vpop.permute.xlu0 %971
        %973 = vrot.lane.b32.xlu0 %v954, 8
        %v974 = vpop.permute.xlu0 %973
        %975 = vrot.lane.b32.xlu0 %v955, 8
        %v976 = vpop.permute.xlu0 %975
        %977 = vrot.lane.b32.xlu0 %v956, 8
        %v978 = vpop.permute.xlu0 %977
        %979 = vrot.lane.b32.xlu0 %v957, 8
        %v980 = vpop.permute.xlu0 %979
        %981 = vrot.lane.b32.xlu0 %v958, 8
        %v982 = vpop.permute.xlu0 %981
        %vm991 = vcmask 130112
        %992 = vst.msk [vmem:[#allocation4] sm:$0xff] %vm991, %v968
        %993 = vst.msk [vmem:[#allocation4 + $0x8] sm:$0xff] %vm991, %v970
        %994 = vst.msk [vmem:[#allocation4 + $0x10] sm:$0xff] %vm991, %v972
        %995 = vst.msk [vmem:[#allocation4 + $0x18] sm:$0xff] %vm991, %v974
        %996 = vst.msk [vmem:[#allocation4 + $0x20] sm:$0xff] %vm991, %v976
        %997 = vst.msk [vmem:[#allocation4 + $0x28] sm:$0xff] %vm991, %v978
        %998 = vst.msk [vmem:[#allocation4 + $0x30] sm:$0xff] %vm991, %v980
        %999 = vst.msk [vmem:[#allocation4 + $0x38] sm:$0xff] %vm991, %v982
        %v1000 = vld [vmem:[#allocation3 + $0x2] sm:$0xff]
        %v1001 = vld [vmem:[#allocation3 + $0x12] sm:$0xff]
        %v1002 = vld [vmem:[#allocation3 + $0x22] sm:$0xff]
        %v1003 = vld [vmem:[#allocation3 + $0x32] sm:$0xff]
        %v1004 = vld [vmem:[#allocation3 + $0x42] sm:$0xff]
        %v1005 = vld [vmem:[#allocation3 + $0x52] sm:$0xff]
        %v1006 = vld [vmem:[#allocation3 + $0x62] sm:$0xff]
        %v1007 = vld [vmem:[#allocation3 + $0x72] sm:$0xff]
        %1016 = vrot.lane.b32.xlu0 %v1000, 16
        %v1017 = vpop.permute.xlu0 %1016
        %1018 = vrot.lane.b32.xlu0 %v1001, 16
        %v1019 = vpop.permute.xlu0 %1018
        %1020 = vrot.lane.b32.xlu0 %v1002, 16
        %v1021 = vpop.permute.xlu0 %1020
        %1022 = vrot.lane.b32.xlu0 %v1003, 16
        %v1023 = vpop.permute.xlu0 %1022
        %1024 = vrot.lane.b32.xlu0 %v1004, 16
        %v1025 = vpop.permute.xlu0 %1024
        %1026 = vrot.lane.b32.xlu0 %v1005, 16
        %v1027 = vpop.permute.xlu0 %1026
        %1028 = vrot.lane.b32.xlu0 %v1006, 16
        %v1029 = vpop.permute.xlu0 %1028
        %1030 = vrot.lane.b32.xlu0 %v1007, 16
        %v1031 = vpop.permute.xlu0 %1030
        %vm1040 = vcmask 195712
        %1041 = vst.msk [vmem:[#allocation4] sm:$0xff] %vm1040, %v1017
        %1042 = vst.msk [vmem:[#allocation4 + $0x8] sm:$0xff] %vm1040, %v1019
        %1043 = vst.msk [vmem:[#allocation4 + $0x10] sm:$0xff] %vm1040, %v1021
        %1044 = vst.msk [vmem:[#allocation4 + $0x18] sm:$0xff] %vm1040, %v1023
        %1045 = vst.msk [vmem:[#allocation4 + $0x20] sm:$0xff] %vm1040, %v1025
        %1046 = vst.msk [vmem:[#allocation4 + $0x28] sm:$0xff] %vm1040, %v1027
        %1047 = vst.msk [vmem:[#allocation4 + $0x30] sm:$0xff] %vm1040, %v1029
        %1048 = vst.msk [vmem:[#allocation4 + $0x38] sm:$0xff] %vm1040, %v1031
        %v1049 = vld [vmem:[%s926] sm:$0xff]
        %v1050 = vld [vmem:[%s926 + $0x10] sm:$0xff]
        %v1051 = vld [vmem:[%s926 + $0x20] sm:$0xff]
        %v1052 = vld [vmem:[%s926 + $0x30] sm:$0xff]
        %v1053 = vld [vmem:[%s926 + $0x40] sm:$0xff]
        %v1054 = vld [vmem:[%s926 + $0x50] sm:$0xff]
        %v1055 = vld [vmem:[%s926 + $0x60] sm:$0xff]
        %v1056 = vld [vmem:[%s926 + $0x70] sm:$0xff]
        %1065 = vrot.lane.b32.xlu0 %v1049, 24
        %v1066 = vpop.permute.xlu0 %1065
        %1067 = vrot.lane.b32.xlu0 %v1050, 24
        %v1068 = vpop.permute.xlu0 %1067
        %1069 = vrot.lane.b32.xlu0 %v1051, 24
        %v1070 = vpop.permute.xlu0 %1069
        %1071 = vrot.lane.b32.xlu0 %v1052, 24
        %v1072 = vpop.permute.xlu0 %1071
        %1073 = vrot.lane.b32.xlu0 %v1053, 24
        %v1074 = vpop.permute.xlu0 %1073
        %1075 = vrot.lane.b32.xlu0 %v1054, 24
        %v1076 = vpop.permute.xlu0 %1075
        %1077 = vrot.lane.b32.xlu0 %v1055, 24
        %v1078 = vpop.permute.xlu0 %1077
        %1079 = vrot.lane.b32.xlu0 %v1056, 24
        %v1080 = vpop.permute.xlu0 %1079
        %vm1089 = vcmask 261312
        %1090 = vst.msk [vmem:[#allocation4] sm:$0xff] %vm1089, %v1066
        %1091 = vst.msk [vmem:[#allocation4 + $0x8] sm:$0xff] %vm1089, %v1068
        %1092 = vst.msk [vmem:[#allocation4 + $0x10] sm:$0xff] %vm1089, %v1070
        %1093 = vst.msk [vmem:[#allocation4 + $0x18] sm:$0xff] %vm1089, %v1072
        %1094 = vst.msk [vmem:[#allocation4 + $0x20] sm:$0xff] %vm1089, %v1074
        %1095 = vst.msk [vmem:[#allocation4 + $0x28] sm:$0xff] %vm1089, %v1076
        %1096 = vst.msk [vmem:[#allocation4 + $0x30] sm:$0xff] %vm1089, %v1078
        %1097 = vst.msk [vmem:[#allocation4 + $0x38] sm:$0xff] %vm1089, %v1080
        %v1098 = vld [vmem:[%s926 + $0x1] sm:$0xff]
        %v1099 = vld [vmem:[%s926 + $0x11] sm:$0xff]
        %v1100 = vld [vmem:[%s926 + $0x21] sm:$0xff]
        %v1101 = vld [vmem:[%s926 + $0x31] sm:$0xff]
        %v1102 = vld [vmem:[%s926 + $0x41] sm:$0xff]
        %v1103 = vld [vmem:[%s926 + $0x51] sm:$0xff]
        %v1104 = vld [vmem:[%s926 + $0x61] sm:$0xff]
        %v1105 = vld [vmem:[%s926 + $0x71] sm:$0xff]
        %1114 = vrot.lane.b32.xlu0 %v1098, 32
        %v1115 = vpop.permute.xlu0 %1114
        %1116 = vrot.lane.b32.xlu0 %v1099, 32
        %v1117 = vpop.permute.xlu0 %1116
        %1118 = vrot.lane.b32.xlu0 %v1100, 32
        %v1119 = vpop.permute.xlu0 %1118
        %1120 = vrot.lane.b32.xlu0 %v1101, 32
        %v1121 = vpop.permute.xlu0 %1120
        %1122 = vrot.lane.b32.xlu0 %v1102, 32
        %v1123 = vpop.permute.xlu0 %1122
        %1124 = vrot.lane.b32.xlu0 %v1103, 32
        %v1125 = vpop.permute.xlu0 %1124
        %1126 = vrot.lane.b32.xlu0 %v1104, 32
        %v1127 = vpop.permute.xlu0 %1126
        %1128 = vrot.lane.b32.xlu0 %v1105, 32
        %v1129 = vpop.permute.xlu0 %1128
        %vm1138 = vcmask 326912
        %1139 = vst.msk [vmem:[#allocation4] sm:$0xff] %vm1138, %v1115
        %1140 = vst.msk [vmem:[#allocation4 + $0x8] sm:$0xff] %vm1138, %v1117
        %1141 = vst.msk [vmem:[#allocation4 + $0x10] sm:$0xff] %vm1138, %v1119
        %1142 = vst.msk [vmem:[#allocation4 + $0x18] sm:$0xff] %vm1138, %v1121
        %1143 = vst.msk [vmem:[#allocation4 + $0x20] sm:$0xff] %vm1138, %v1123
        %1144 = vst.msk [vmem:[#allocation4 + $0x28] sm:$0xff] %vm1138, %v1125
        %1145 = vst.msk [vmem:[#allocation4 + $0x30] sm:$0xff] %vm1138, %v1127
        %1146 = vst.msk [vmem:[#allocation4 + $0x38] sm:$0xff] %vm1138, %v1129
        %v1147 = vld [vmem:[%s926 + $0x2] sm:$0xff]
        %v1148 = vld [vmem:[%s926 + $0x12] sm:$0xff]
        %v1149 = vld [vmem:[%s926 + $0x22] sm:$0xff]
        %v1150 = vld [vmem:[%s926 + $0x32] sm:$0xff]
        %v1151 = vld [vmem:[%s926 + $0x42] sm:$0xff]
        %v1152 = vld [vmem:[%s926 + $0x52] sm:$0xff]
        %v1153 = vld [vmem:[%s926 + $0x62] sm:$0xff]
        %v1154 = vld [vmem:[%s926 + $0x72] sm:$0xff]
        %1163 = vrot.lane.b32.xlu0 %v1147, 40
        %v1164 = vpop.permute.xlu0 %1163
        %1165 = vrot.lane.b32.xlu0 %v1148, 40
        %v1166 = vpop.permute.xlu0 %1165
        %1167 = vrot.lane.b32.xlu0 %v1149, 40
        %v1168 = vpop.permute.xlu0 %1167
        %1169 = vrot.lane.b32.xlu0 %v1150, 40
        %v1170 = vpop.permute.xlu0 %1169
        %1171 = vrot.lane.b32.xlu0 %v1151, 40
        %v1172 = vpop.permute.xlu0 %1171
        %1173 = vrot.lane.b32.xlu0 %v1152, 40
        %v1174 = vpop.permute.xlu0 %1173
        %1175 = vrot.lane.b32.xlu0 %v1153, 40
        %v1176 = vpop.permute.xlu0 %1175
        %1177 = vrot.lane.b32.xlu0 %v1154, 40
        %v1178 = vpop.permute.xlu0 %1177
        %vm1187 = vcmask 392512
        %1188 = vst.msk [vmem:[#allocation4] sm:$0xff] %vm1187, %v1164
        %1189 = vst.msk [vmem:[#allocation4 + $0x8] sm:$0xff] %vm1187, %v1166
        %1190 = vst.msk [vmem:[#allocation4 + $0x10] sm:$0xff] %vm1187, %v1168
        %1191 = vst.msk [vmem:[#allocation4 + $0x18] sm:$0xff] %vm1187, %v1170
        %1192 = vst.msk [vmem:[#allocation4 + $0x20] sm:$0xff] %vm1187, %v1172
        %1193 = vst.msk [vmem:[#allocation4 + $0x28] sm:$0xff] %vm1187, %v1174
        %1194 = vst.msk [vmem:[#allocation4 + $0x30] sm:$0xff] %vm1187, %v1176
        %1195 = vst.msk [vmem:[#allocation4 + $0x38] sm:$0xff] %vm1187, %v1178
        %s1196 = scalar_lea.vmem [#allocation3], 32
        %v1197 = vld [vmem:[%s1196] sm:$0xff]
        %v1198 = vld [vmem:[%s1196 + $0x10] sm:$0xff]
        %v1199 = vld [vmem:[%s1196 + $0x20] sm:$0xff]
        %v1200 = vld [vmem:[%s1196 + $0x30] sm:$0xff]
        %v1201 = vld [vmem:[%s1196 + $0x40] sm:$0xff]
        %v1202 = vld [vmem:[%s1196 + $0x50] sm:$0xff]
        %v1203 = vld [vmem:[%s1196 + $0x60] sm:$0xff]
        %v1204 = vld [vmem:[%s1196 + $0x70] sm:$0xff]
        %1213 = vrot.lane.b32.xlu0 %v1197, 48
        %v1214 = vpop.permute.xlu0 %1213
        %1215 = vrot.lane.b32.xlu0 %v1198, 48
        %v1216 = vpop.permute.xlu0 %1215
        %1217 = vrot.lane.b32.xlu0 %v1199, 48
        %v1218 = vpop.permute.xlu0 %1217
        %1219 = vrot.lane.b32.xlu0 %v1200, 48
        %v1220 = vpop.permute.xlu0 %1219
        %1221 = vrot.lane.b32.xlu0 %v1201, 48
        %v1222 = vpop.permute.xlu0 %1221
        %1223 = vrot.lane.b32.xlu0 %v1202, 48
        %v1224 = vpop.permute.xlu0 %1223
        %1225 = vrot.lane.b32.xlu0 %v1203, 48
        %v1226 = vpop.permute.xlu0 %1225
        %1227 = vrot.lane.b32.xlu0 %v1204, 48
        %v1228 = vpop.permute.xlu0 %1227
        %vm1237 = vcmask 458112
        %1238 = vst.msk [vmem:[#allocation4] sm:$0xff] %vm1237, %v1214
        %1239 = vst.msk [vmem:[#allocation4 + $0x8] sm:$0xff] %vm1237, %v1216
        %1240 = vst.msk [vmem:[#allocation4 + $0x10] sm:$0xff] %vm1237, %v1218
        %1241 = vst.msk [vmem:[#allocation4 + $0x18] sm:$0xff] %vm1237, %v1220
        %1242 = vst.msk [vmem:[#allocation4 + $0x20] sm:$0xff] %vm1237, %v1222
        %1243 = vst.msk [vmem:[#allocation4 + $0x28] sm:$0xff] %vm1237, %v1224
        %1244 = vst.msk [vmem:[#allocation4 + $0x30] sm:$0xff] %vm1237, %v1226
        %1245 = vst.msk [vmem:[#allocation4 + $0x38] sm:$0xff] %vm1237, %v1228
        %v1246 = vld [vmem:[%s1196 + $0x1] sm:$0xff]
        %v1247 = vld [vmem:[%s1196 + $0x11] sm:$0xff]
        %v1248 = vld [vmem:[%s1196 + $0x21] sm:$0xff]
        %v1249 = vld [vmem:[%s1196 + $0x31] sm:$0xff]
        %v1250 = vld [vmem:[%s1196 + $0x41] sm:$0xff]
        %v1251 = vld [vmem:[%s1196 + $0x51] sm:$0xff]
        %v1252 = vld [vmem:[%s1196 + $0x61] sm:$0xff]
        %v1253 = vld [vmem:[%s1196 + $0x71] sm:$0xff]
        %1262 = vrot.lane.b32.xlu0 %v1246, 56
        %v1263 = vpop.permute.xlu0 %1262
        %1264 = vrot.lane.b32.xlu0 %v1247, 56
        %v1265 = vpop.permute.xlu0 %1264
        %1266 = vrot.lane.b32.xlu0 %v1248, 56
        %v1267 = vpop.permute.xlu0 %1266
        %1268 = vrot.lane.b32.xlu0 %v1249, 56
        %v1269 = vpop.permute.xlu0 %1268
        %1270 = vrot.lane.b32.xlu0 %v1250, 56
        %v1271 = vpop.permute.xlu0 %1270
        %1272 = vrot.lane.b32.xlu0 %v1251, 56
        %v1273 = vpop.permute.xlu0 %1272
        %1274 = vrot.lane.b32.xlu0 %v1252, 56
        %v1275 = vpop.permute.xlu0 %1274
        %1276 = vrot.lane.b32.xlu0 %v1253, 56
        %v1277 = vpop.permute.xlu0 %1276
        %vm1286 = vcmask 523712
        %1287 = vst.msk [vmem:[#allocation4] sm:$0xff] %vm1286, %v1263
        %1288 = vst.msk [vmem:[#allocation4 + $0x8] sm:$0xff] %vm1286, %v1265
        %1289 = vst.msk [vmem:[#allocation4 + $0x10] sm:$0xff] %vm1286, %v1267
        %1290 = vst.msk [vmem:[#allocation4 + $0x18] sm:$0xff] %vm1286, %v1269
        %1291 = vst.msk [vmem:[#allocation4 + $0x20] sm:$0xff] %vm1286, %v1271
        %1292 = vst.msk [vmem:[#allocation4 + $0x28] sm:$0xff] %vm1286, %v1273
        %1293 = vst.msk [vmem:[#allocation4 + $0x30] sm:$0xff] %vm1286, %v1275
        %1294 = vst.msk [vmem:[#allocation4 + $0x38] sm:$0xff] %vm1286, %v1277
        %v1295 = vld [vmem:[%s1196 + $0x2] sm:$0xff]
        %v1296 = vld [vmem:[%s1196 + $0x12] sm:$0xff]
        %v1297 = vld [vmem:[%s1196 + $0x22] sm:$0xff]
        %v1298 = vld [vmem:[%s1196 + $0x32] sm:$0xff]
        %v1299 = vld [vmem:[%s1196 + $0x42] sm:$0xff]
        %v1300 = vld [vmem:[%s1196 + $0x52] sm:$0xff]
        %v1301 = vld [vmem:[%s1196 + $0x62] sm:$0xff]
        %v1302 = vld [vmem:[%s1196 + $0x72] sm:$0xff]
        %1311 = vrot.lane.b32.xlu0 %v1295, 64
        %v1312 = vpop.permute.xlu0 %1311
        %1313 = vrot.lane.b32.xlu0 %v1296, 64
        %v1314 = vpop.permute.xlu0 %1313
        %1315 = vrot.lane.b32.xlu0 %v1297, 64
        %v1316 = vpop.permute.xlu0 %1315
        %1317 = vrot.lane.b32.xlu0 %v1298, 64
        %v1318 = vpop.permute.xlu0 %1317
        %1319 = vrot.lane.b32.xlu0 %v1299, 64
        %v1320 = vpop.permute.xlu0 %1319
        %1321 = vrot.lane.b32.xlu0 %v1300, 64
        %v1322 = vpop.permute.xlu0 %1321
        %1323 = vrot.lane.b32.xlu0 %v1301, 64
        %v1324 = vpop.permute.xlu0 %1323
        %1325 = vrot.lane.b32.xlu0 %v1302, 64
        %v1326 = vpop.permute.xlu0 %1325
        %vm1335 = vcmask 589312
        %1336 = vst.msk [vmem:[#allocation4] sm:$0xff] %vm1335, %v1312
        %1337 = vst.msk [vmem:[#allocation4 + $0x8] sm:$0xff] %vm1335, %v1314
        %1338 = vst.msk [vmem:[#allocation4 + $0x10] sm:$0xff] %vm1335, %v1316
        %1339 = vst.msk [vmem:[#allocation4 + $0x18] sm:$0xff] %vm1335, %v1318
        %1340 = vst.msk [vmem:[#allocation4 + $0x20] sm:$0xff] %vm1335, %v1320
        %1341 = vst.msk [vmem:[#allocation4 + $0x28] sm:$0xff] %vm1335, %v1322
        %1342 = vst.msk [vmem:[#allocation4 + $0x30] sm:$0xff] %vm1335, %v1324
        %1343 = vst.msk [vmem:[#allocation4 + $0x38] sm:$0xff] %vm1335, %v1326
        %v1344 = vld [vmem:[#allocation4] sm:$0xff]
        %v1345 = vld [vmem:[#allocation4 + $0x8] sm:$0xff]
        %v1346 = vld [vmem:[#allocation4 + $0x10] sm:$0xff]
        %v1347 = vld [vmem:[#allocation4 + $0x18] sm:$0xff]
        %v1348 = vld [vmem:[#allocation4 + $0x20] sm:$0xff]
        %v1349 = vld [vmem:[#allocation4 + $0x28] sm:$0xff]
        %v1350 = vld [vmem:[#allocation4 + $0x30] sm:$0xff]
        %v1351 = vld [vmem:[#allocation4 + $0x38] sm:$0xff]
        %v1352 = vld [vmem:[%s3] sm:$0xff]
        %v1353 = vld [vmem:[%s3 + $0x8] sm:$0xff]
        %v1354 = vld [vmem:[%s3 + $0x10] sm:$0xff]
        %v1355 = vld [vmem:[%s3 + $0x18] sm:$0xff]
        %v1356 = vld [vmem:[%s3 + $0x20] sm:$0xff]
        %v1357 = vld [vmem:[%s3 + $0x28] sm:$0xff]
        %v1358 = vld [vmem:[%s3 + $0x30] sm:$0xff]
        %v1359 = vld [vmem:[%s3 + $0x38] sm:$0xff]
        %v1360 = vld [vmem:[%s3 + $0x40] sm:$0xff]
        %v1361 = vld [vmem:[%s4] sm:$0x1]
        %v1363 = vlaneseq
        %v1364 = vshrl.u32 %v1363, 7
        %v1365 = vsub.s32 0, %v1364
        %v1366 = vrot.slane %v1361, %v1365
        %vm1368 = vcmask 588800
        %v1370 = vsel %vm1368, %v1344, 0
        %v1373 = vsel %vm1368, %v1345, 0
        %v1376 = vsel %vm1368, %v1346, 0
        %v1379 = vsel %vm1368, %v1347, 0
        %v1382 = vsel %vm1368, %v1348, 0
        %v1385 = vsel %vm1368, %v1349, 0
        %v1388 = vsel %vm1368, %v1350, 0
        %v1391 = vsel %vm1368, %v1351, 0
        %1393 = vmatprep.subr.mxu0 0.0
        %1394 = vmatpush1.msra.mxu0 %v1352
        %1395 = vmatprep.subr.mxu0 0.0
        %1396 = vmatpush1.msra.mxu0 %v1353
        %1397 = vmatprep.subr.mxu0 0.0
        %1398 = vmatpush1.msra.mxu0 %v1354
        %1399 = vmatprep.subr.mxu0 0.0
        %1400 = vmatpush1.msra.mxu0 %v1355
        %1401 = vmatprep.subr.mxu0 0.0
        %1402 = vmatpush1.msra.mxu0 %v1356
        %1403 = vmatprep.subr.mxu0 0.0
        %1404 = vmatpush1.msra.mxu0 %v1357
        %1405 = vmatprep.subr.mxu0 0.0
        %1406 = vmatpush1.msra.mxu0 %v1358
        %1407 = vmatprep.subr.mxu0 0.0
        %1408 = vmatpush1.msra.mxu0 %v1359
        %1409 = vmatprep.subr.mxu0 0.0
        %1410 = vmatpush1.msra.mxu0 %v1360
        %1411 = vmatprep.subr.mxu0 0.0
        %1412 = vmatpush1.msra.mxu0 0.0
        %1413 = vmatprep.subr.mxu0 0.0
        %1414 = vmatpush1.msra.mxu0 0.0
        %1415 = vmatprep.subr.mxu0 0.0
        %1416 = vmatpush1.msra.mxu0 0.0
        %1417 = vmatprep.subr.mxu0 0.0
        %1418 = vmatpush1.msra.mxu0 0.0
        %1419 = vmatprep.subr.mxu0 0.0
        %1420 = vmatpush1.msra.mxu0 0.0
        %1421 = vmatprep.subr.mxu0 0.0
        %1422 = vmatpush1.msra.mxu0 0.0
        %1423 = vmatprep.subr.mxu0 0.0
        %1424 = vmatpush1.msra.mxu0 0.0
        %1425 = vmatprep.subr.mxu0 0.0
        %1426 = vmatpush1.msra.mxu0 0.0
        %1427 = vmatprep.subr.mxu0 0.0
        %1428 = vmatpush1.msra.mxu0 0.0
        %1429 = vmatprep.subr.mxu0 0.0
        %1430 = vmatpush1.msra.mxu0 0.0
        %1431 = vmatprep.subr.mxu0 0.0
        %1432 = vmatpush1.msra.mxu0 0.0
        %1433 = vmatprep.subr.mxu0 0.0
        %1434 = vmatpush1.msra.mxu0 0.0
        %1435 = vmatprep.subr.mxu0 0.0
        %1436 = vmatpush1.msra.mxu0 0.0
        %1437 = vmatprep.subr.mxu0 0.0
        %1438 = vmatpush1.msra.mxu0 0.0
        %1439 = vmatprep.subr.mxu0 0.0
        %1440 = vmatpush1.msra.mxu0 0.0
        %1441 = vmatprep.subr.mxu0 0.0
        %1442 = vmatpush1.msra.mxu0 0.0
        %1443 = vmatprep.subr.mxu0 0.0
        %1444 = vmatpush1.msra.mxu0 0.0
        %1445 = vmatprep.subr.mxu0 0.0
        %1446 = vmatpush1.msra.mxu0 0.0
        %1447 = vmatprep.subr.mxu0 0.0
        %1448 = vmatpush1.msra.mxu0 0.0
        %1449 = vmatprep.subr.mxu0 0.0
        %1450 = vmatpush1.msra.mxu0 0.0
        %1451 = vmatprep.subr.mxu0 0.0
        %1452 = vmatpush1.msra.mxu0 0.0
        %1453 = vmatprep.subr.mxu0 0.0
        %1454 = vmatpush1.msra.mxu0 0.0
        %1455 = vmatprep.subr.mxu0 0.0
        %1456 = vmatpush1.msra.mxu0 0.0
        %1457 = vmatprep.mubr.f32.mxu0 0.0
        %1458 = vmatmul.mubr.f32.gmra.mrb[0].mxu0 %v1370
        %v1459 = vpop.f32.mrb[0].mxu0
        %v1460 = vadd.f32 %v1366, %v1459
        %v1461 = vpop.f32.mrb[0].mxu0
        %1462 = vmatprep.mubr.f32.mxu0 0.0
        %1463 = vmatmul.mubr.f32.gmra.mrb[0].mxu0 %v1373
        %v1464 = vpop.f32.mrb[0].mxu0
        %v1465 = vadd.f32 %v1366, %v1464
        %v1466 = vpop.f32.mrb[0].mxu0
        %1467 = vmatprep.mubr.f32.mxu0 0.0
        %1468 = vmatmul.mubr.f32.gmra.mrb[0].mxu0 %v1376
        %v1469 = vpop.f32.mrb[0].mxu0
        %v1470 = vadd.f32 %v1366, %v1469
        %v1471 = vpop.f32.mrb[0].mxu0
        %1472 = vmatprep.mubr.f32.mxu0 0.0
        %1473 = vmatmul.mubr.f32.gmra.mrb[0].mxu0 %v1379
        %v1474 = vpop.f32.mrb[0].mxu0
        %v1475 = vadd.f32 %v1366, %v1474
        %v1476 = vpop.f32.mrb[0].mxu0
        %1477 = vmatprep.mubr.f32.mxu0 0.0
        %1478 = vmatmul.mubr.f32.gmra.mrb[0].mxu0 %v1382
        %v1479 = vpop.f32.mrb[0].mxu0
        %v1480 = vadd.f32 %v1366, %v1479
        %v1481 = vpop.f32.mrb[0].mxu0
        %1482 = vmatprep.mubr.f32.mxu0 0.0
        %1483 = vmatmul.mubr.f32.gmra.mrb[0].mxu0 %v1385
        %v1484 = vpop.f32.mrb[0].mxu0
        %v1485 = vadd.f32 %v1366, %v1484
        %v1486 = vpop.f32.mrb[0].mxu0
        %1487 = vmatprep.mubr.f32.mxu0 0.0
        %1488 = vmatmul.mubr.f32.gmra.mrb[0].mxu0 %v1388
        %v1489 = vpop.f32.mrb[0].mxu0
        %v1490 = vadd.f32 %v1366, %v1489
        %v1491 = vpop.f32.mrb[0].mxu0
        %1492 = vmatprep.mubr.f32.mxu0 0.0
        %1493 = vmatmul.mubr.f32.gmra.mrb[0].mxu0 %v1391
        %v1494 = vpop.f32.mrb[0].mxu0
        %v1495 = vadd.f32 %v1366, %v1494
        %v1496 = vpop.f32.mrb[0].mxu0
        %1497 = vdwg.mxu0
        %vm1498 = vcmp.gt.f32.partialorder %v1460, 0.0
        %vm1499 = vcmp.gt.f32.partialorder %v1465, 0.0
        %vm1500 = vcmp.gt.f32.partialorder %v1470, 0.0
        %vm1501 = vcmp.gt.f32.partialorder %v1475, 0.0
        %vm1502 = vcmp.gt.f32.partialorder %v1480, 0.0
        %vm1503 = vcmp.gt.f32.partialorder %v1485, 0.0
        %vm1504 = vcmp.gt.f32.partialorder %v1490, 0.0
        %vm1505 = vcmp.gt.f32.partialorder %v1495, 0.0
        %v1506 = vmul.f32 %v1460, 0.2
        %v1507 = vmul.f32 %v1465, 0.2
        %v1508 = vmul.f32 %v1470, 0.2
        %v1509 = vmul.f32 %v1475, 0.2
        %v1510 = vmul.f32 %v1480, 0.2
        %v1511 = vmul.f32 %v1485, 0.2
        %v1512 = vmul.f32 %v1490, 0.2
        %v1513 = vmul.f32 %v1495, 0.2
        %v1514 = vsel %vm1498, %v1460, %v1506
        %v1515 = vsel %vm1499, %v1465, %v1507
        %v1516 = vsel %vm1500, %v1470, %v1508
        %v1517 = vsel %vm1501, %v1475, %v1509
        %v1518 = vsel %vm1502, %v1480, %v1510
        %v1519 = vsel %vm1503, %v1485, %v1511
        %v1520 = vsel %vm1504, %v1490, %v1512
        %v1521 = vsel %vm1505, %v1495, %v1513
        %1522 = vst [vmem:[%s220] sm:$0xff] %v1514
        %1523 = vst [vmem:[%s220 + $0x8] sm:$0xff] %v1515
        %1524 = vst [vmem:[%s220 + $0x10] sm:$0xff] %v1516
        %1525 = vst [vmem:[%s220 + $0x18] sm:$0xff] %v1517
        %1526 = vst [vmem:[%s220 + $0x20] sm:$0xff] %v1518
        %1527 = vst [vmem:[%s220 + $0x28] sm:$0xff] %v1519
        %1528 = vst [vmem:[%s220 + $0x30] sm:$0xff] %v1520
        %1529 = vst [vmem:[%s220 + $0x38] sm:$0xff] %v1521
        %s1530 = sand.u32 %s137, 1
        %s1531 = scalar_lea.sflag [#allocation6], %s1530
        %s1532 = sand.u32 %s137, 1
        %s1533 = smul.addr %s1532, 64
        %s1534 = scalar_lea.vmem [#allocation5], %s1533
        // Predicated region
        $region41: #{tpu_custom_call.1} parent=39 // pred_check
          %p1535 = pneg %p147
        $region42: #{tpu_custom_call.1} parent=39 // pred_check_branch
          %1537 = sbr.rel (%p1535) target = $region44
        $region43: #{tpu_custom_call.1} parent=39 // pred_region
          %s1539 = ssub.s32 1024, 1024
          %1540 = vsyncadd %s1531, %s1539
          %s1541 = smul.addr %s19, 8
          %s1542 = smul.addr %s1541, 128
          %s1543 = scalar_lea.hbm %s5, %s1542
          %s1544 = sshll.u32 %s1534, 4
          %s1545 = int_to_ptr.vmem [resolvable:$true] %s1544
          %1550 = dma.vmem_to_hbm [thread:$0]  %s1545, 1024, %s1543, %s1531, 128, 128, 8
        $region44: #{tpu_custom_call.1} parent=39 // pred_fallthru
          _
      $region40: #{tpu_custom_call.1} parent=5 // pred_fallthru
        _
      %p1551 = scmp.le.s32.totalorder 2, %s14
      // Predicated region
      $region45: #{tpu_custom_call.1} parent=5 // pred_check
        %p1552 = pneg %p1551
      $region46: #{tpu_custom_call.1} parent=5 // pred_check_branch
        %1554 = sbr.rel (%p1552) target = $region48
      $region47: #{tpu_custom_call.1} parent=5 // pred_region
        %s1555 = ssub.s32 %s14, 2
        // Predicated region
        $region49: #{tpu_custom_call.1} parent=47 // pred_check
          %p1556 = pneg %p153
        $region50: #{tpu_custom_call.1} parent=47 // pred_check_branch
          %1558 = sbr.rel (%p1556) target = $region52
        $region51: #{tpu_custom_call.1} parent=47 // pred_region
          %s1559 = sand.u32 %s138, 1
          %s1560 = scalar_lea.sflag [#allocation6], %s1559
          %s1561 = sand.u32 %s138, 1
          %s1562 = smul.addr %s1561, 64
          %s1563 = scalar_lea.vmem [#allocation5], %s1562
          %1564 = dma.done %s1560, 1024
        $region52: #{tpu_custom_call.1} parent=47 // pred_fallthru
          _
      $region48: #{tpu_custom_call.1} parent=5 // pred_fallthru
        _
    $region6: #{tpu_custom_call.1} parent=1 // loop_footer
      %s18 = sadd.s32 1, %s14
    $region7: #{tpu_custom_call.1} parent=1 // loop_footer_branch
      %13 = sbr.rel target = $region3
    $region8: #{tpu_custom_call.1} parent=1 // loop_exit
      _
    %1565 = vsyncpa [#allocation6], 1
    %s1566 = scalar_lea.sflag [#allocation6], 1
    %1567 = vsyncpa %s1566, 1

</llo_original>
